<compile_context>
chip_gen: v7x
topology: tpu7x:2x2x1
jax: 0.10.0
libtpu: 0.0.40
codegen_flags: <defaults>
</compile_context>

<pallas_src>
import jax
import jax.numpy as jnp
from jax.experimental import pallas as pl
from jax.experimental.pallas import tpu as pltpu


# ----------------------------- in-kernel helpers -----------------------------


def _shift_rows(x, d):
    """out[i, :] = x[(i + d) % R, :] -- sublane rotate, keeps full aligned shape."""
    if d == 0:
        return x
    return pltpu.roll(x, x.shape[0] - d, axis=0)


def _shift_cols(x, d):
    """out[:, j] = x[:, (j + d) % C] -- lane rotate, keeps full aligned shape."""
    if d == 0:
        return x
    return pltpu.roll(x, x.shape[1] - d, axis=1)


def _conv3x3(x, w_ref, bias, d):
    """Dense 3x3 cross-correlation with taps spaced `d` apart (d=1 plain conv,
    d=2 when the input is a dense pooled plane whose valid samples sit on a
    stride-2 grid).  Factored into 3 column partial sums: 2 sublane rolls +
    2 lane rolls total, bias fused into the first partial.  Positions whose taps
    wrap (or cross a sample boundary in the flattened batch plane) hold garbage
    that never reaches a valid output."""
    x1 = _shift_rows(x, d)
    x2 = _shift_rows(x, 2 * d)
    acc = None
    for dj in range(3):
        s = w_ref[dj] * x + w_ref[3 + dj] * x1 + w_ref[6 + dj] * x2
        s = _shift_cols(s, dj * d)
        acc = (s + bias) if acc is None else (acc + s)
    return acc


def _pool2x2_relu(z, step):
    """Dense 2x2/stride-2 max + ReLU with the two taps `step` apart.  For step=1
    the pooled values land at even (row, col); for step=2 (input already dilated
    once) at indices that are multiples of 4.  relu(max) == max(relu)."""
    m = jnp.maximum(z, _shift_cols(z, step))
    m = jnp.maximum(m, _shift_rows(m, step))
    return jnp.maximum(m, 0.0)


def _branch(x, w1_ref, w2_ref, b1, b2):
    """conv -> pool+relu -> conv -> pool+relu on a dense (bb*H, W) plane.
    Valid pooled features end up at positions (4r, 4c)."""
    z = _pool2x2_relu(_conv3x3(x, w1_ref, b1, 1), 1)
    z = _pool2x2_relu(_conv3x3(z, w2_ref, b2, 2), 2)
    return z


def _fused_kernel(xc_ref, xp_ref, wtc_ref, wtp_ref, seg_ref,
                  w1c_ref, w2c_ref, w1p_ref, w2p_ref, b_ref, o_ref):
    # bf16 over HBM, f32 in compute (portable across v5e/v6e/v7x).
    xc = xc_ref[...].astype(jnp.float32)                    # (bb*H, Wc)
    xp = xp_ref[...].astype(jnp.float32)                    # (bb*H, Wp)
    mc = _branch(xc, w1c_ref, w2c_ref, b_ref[0], b_ref[1])
    mp = _branch(xp, w1p_ref, w2p_ref, b_ref[2], b_ref[3])
    # Folded Linear+affine_out tail: elementwise multiply against the per-branch
    # zero-scattered weight plane (tiled per sample), then a per-sample sum.
    prod = mc * wtc_ref[...] + mp * wtp_ref[...]            # (bb*H, W)
    # Segment sum over each sample's H rows via one tiny MXU matmul
    # (avoids any in-kernel reshape); FLOPs are negligible.
    seg = jnp.dot(seg_ref[...], prod,
                  preferred_element_type=jnp.float32)       # (bb, W)
    res = jnp.sum(seg, axis=1, keepdims=True) + b_ref[4]    # (bb, 1)
    # Lane-dense output store; only column 0 is read back.
    o_ref[...] = jnp.broadcast_to(res, o_ref.shape)


# --------------------------- JAX-side wrapper ---------------------------------


def _round_up(x, m):
    return pl.cdiv(x, m) * m


def cnn_block_forward(x_ctx, x_per, params, *, batch_block=32):
    B, H, w_ctx = x_ctx.shape
    w_per = x_per.shape[2]
    wpad_c = params["w_plane_c"].shape[1]
    wpad_p = params["w_plane_p"].shape[1]
    assert params["w_plane_c"].shape[0] == H and params["w_plane_p"].shape[0] == H
    assert wpad_c >= w_ctx and wpad_p >= w_per
    assert wpad_c % 128 == 0 and wpad_p % 128 == 0 and H % 8 == 0

    # Batch blocking: pad B up to a multiple of the block instead of falling
    # back to one giant block (keeps VMEM bounded and the grid populated so
    # megacore "parallel" sharding has >= 2 blocks to split for large batches).
    if B <= batch_block:
        bb, b_pad = B, B
    else:
        bb = _round_up(batch_block, 8)          # output block needs 8-row tiles
        b_pad = _round_up(B, bb)
    nb = b_pad // bb

    def prep(x, wpad):
        # zero-pad (batch, lane), cast to bf16 for the HBM DMA, flatten to 2-D so
        # every in-kernel value is a plain (8,128)-aligned plane.
        x = jnp.pad(x, ((0, b_pad - B), (0, 0), (0, wpad - x.shape[2])))
        return x.astype(jnp.bfloat16).reshape(b_pad * H, wpad)

    xc2 = prep(x_ctx, wpad_c)
    xp2 = prep(x_per, wpad_p)

    # Folded output-weight planes, tiled once per batch block (32 KB -> bb*32 KB),
    # and the per-sample segment-sum matrix (block-row indicator).
    wtc = jnp.tile(params["w_plane_c"], (bb, 1))            # (bb*H, wpad_c)
    wtp = jnp.tile(params["w_plane_p"], (bb, 1))            # (bb*H, wpad_p)
    seg_mat = jnp.repeat(jnp.eye(bb, dtype=jnp.float32), H, axis=1)   # (bb, bb*H)
    bias_pack = jnp.concatenate([params["b_c1"], params["b_c2"],
                                 params["b_p1"], params["b_p2"],
                                 params["b_fold"]])          # (5,) SMEM scalars

    smem = pl.BlockSpec(memory_space=pltpu.MemorySpace.SMEM)
    out_lanes = 128                                          # lane-dense store

    out = pl.pallas_call(
        _fused_kernel,
        grid=(nb,),
        in_specs=[
            pl.BlockSpec((bb * H, wpad_c), lambda i: (i, 0)),
            pl.BlockSpec((bb * H, wpad_p), lambda i: (i, 0)),
            pl.BlockSpec((bb * H, wpad_c), lambda i: (0, 0)),   # invariant weights
            pl.BlockSpec((bb * H, wpad_p), lambda i: (0, 0)),
            pl.BlockSpec((bb, bb * H), lambda i: (0, 0)),
            smem, smem, smem, smem, smem,
        ],
        out_specs=pl.BlockSpec((bb, out_lanes), lambda i: (i, 0)),
        out_shape=jax.ShapeDtypeStruct((b_pad, out_lanes), jnp.float32),
        compiler_params=pltpu.CompilerParams(
            dimension_semantics=("parallel",),      # shard batch blocks over TCs
            vmem_limit_bytes=48 * 1024 * 1024,      # > v5e 16MiB default, < v7x 64MiB
        ),
    )(xc2, xp2, wtc, wtp, seg_mat,
      params["w_c1"].reshape(9), params["w_c2"].reshape(9),
      params["w_p1"].reshape(9), params["w_p2"].reshape(9),
      bias_pack)

    # Only column 0 is real; matches torch's `.squeeze()` (scalar when B == 1).
    return jnp.squeeze(out[:B, 0:1])


# --------------------------- parameters --------------------------------------


def _flatten_dims(h, w):
    h1, w1 = h - 2, w - 2
    hp, wp = h1 // 2, w1 // 2
    return (hp - 2) // 2, (wp - 2) // 2


def make_params(key, *, h=32, w_ctx=256, w_per=232, hidden=200):
    def xavier(k, shape, fan_in, fan_out):
        std = (2.0 / (fan_in + fan_out)) ** 0.5
        return std * jax.random.normal(k, shape, jnp.float32)

    hf, wf_c = _flatten_dims(h, w_ctx)          # (6, 62) -> Linear(372, 200)
    _, wf_p = _flatten_dims(h, w_per)           # (6, 56) -> Linear(336, 200)
    assert hf * wf_c == 372 and hf * wf_p == 336
    wpad_c = _round_up(w_ctx, 128)
    wpad_p = _round_up(w_per, 128)

    ks = jax.random.split(key, 14)
    # Linear weights stored pre-transposed (in_features, out_features).
    wl_c = xavier(ks[4], (hf * wf_c, hidden), hf * wf_c, hidden)
    bl_c = 0.05 * jax.random.normal(ks[5], (hidden,), jnp.float32)
    wl_p = xavier(ks[10], (hf * wf_p, hidden), hf * wf_p, hidden)
    bl_p = 0.05 * jax.random.normal(ks[11], (hidden,), jnp.float32)
    w_out = xavier(ks[12], (1200, 1), 1200, 1)        # declared Linear(1200, 1)
    b_out = 0.05 * jax.random.normal(ks[13], (1,), jnp.float32)

    # TODO(synk): the PyTorch module declares affine_out = Linear(1200, 1) but its
    # forward only feeds the 400-dim concat of the two branch outputs (a shape bug
    # in the source); we apply the first 400 input rows of the declared weight.
    hp = jax.lax.Precision.HIGHEST
    wo_c = w_out[:hidden, 0]
    wo_p = w_out[hidden:2 * hidden, 0]
    # Fold Linear + affine_out host-side (no nonlinearity between them).
    v_c = jnp.dot(wl_c, wo_c, precision=hp)           # (372,)
    v_p = jnp.dot(wl_p, wo_p, precision=hp)           # (336,)
    b_fold = (jnp.dot(bl_c, wo_c, precision=hp)
              + jnp.dot(bl_p, wo_p, precision=hp) + b_out[0])[None]
    # Scatter into dense planes: valid pooled feature (r, c) lives at (4r, 4c)
    # of the dilated in-kernel plane; every other entry is exactly zero, so the
    # wrap / cross-sample garbage positions contribute nothing.
    plane_c = jnp.zeros((h, wpad_c), jnp.float32)
    plane_c = plane_c.at[0:4 * hf:4, 0:4 * wf_c:4].set(v_c.reshape(hf, wf_c))
    plane_p = jnp.zeros((h, wpad_p), jnp.float32)
    plane_p = plane_p.at[0:4 * hf:4, 0:4 * wf_p:4].set(v_p.reshape(hf, wf_p))

    return {
        # conv weights kept as (3, 3): in/out channels are both 1.
        "w_c1": xavier(ks[0], (3, 3), 9, 9),
        "b_c1": 0.05 * jax.random.normal(ks[1], (1,), jnp.float32),
        "w_c2": xavier(ks[2], (3, 3), 9, 9),
        "b_c2": 0.05 * jax.random.normal(ks[3], (1,), jnp.float32),
        "w_p1": xavier(ks[6], (3, 3), 9, 9),
        "b_p1": 0.05 * jax.random.normal(ks[7], (1,), jnp.float32),
        "w_p2": xavier(ks[8], (3, 3), 9, 9),
        "b_p2": 0.05 * jax.random.normal(ks[9], (1,), jnp.float32),
        # folded output weights used by the kernel
        "w_plane_c": plane_c, "w_plane_p": plane_p, "b_fold": b_fold,
        # raw copies used only by the pure-JAX reference check
        "wl_c": wl_c, "bl_c": bl_c, "wl_p": wl_p, "bl_p": bl_p,
        "w_out": w_out, "b_out": b_out,
    }


# --------------------------- pure-JAX reference -------------------------------


def reference_forward(x_ctx, x_per, params):
    hp = jax.lax.Precision.HIGHEST

    def conv(z, wk, bk):
        b_, h_, w_ = z.shape
        acc = jnp.zeros((b_, h_ - 2, w_ - 2), jnp.float32) + bk
        for di in range(3):
            for dj in range(3):
                acc = acc + wk[di, dj] * z[:, di:di + h_ - 2, dj:dj + w_ - 2]
        return acc

    def pool_relu(z):
        b_, h_, w_ = z.shape
        ho, wo = h_ // 2, w_ // 2
        z = z[:, :2 * ho, :2 * wo]
        m = jnp.maximum(jnp.maximum(z[:, 0::2, 0::2], z[:, 0::2, 1::2]),
                        jnp.maximum(z[:, 1::2, 0::2], z[:, 1::2, 1::2]))
        return jnp.maximum(m, 0.0)

    def branch(x, w1, b1, w2, b2, wl, bl):
        z = pool_relu(conv(x, w1, b1[0]))
        z = pool_relu(conv(z, w2, b2[0]))
        feat = z.reshape(z.shape[0], -1)
        return jnp.dot(feat, wl, precision=hp) + bl

    vc = branch(x_ctx, params["w_c1"], params["b_c1"], params["w_c2"],
                params["b_c2"], params["wl_c"], params["bl_c"])
    vp = branch(x_per, params["w_p1"], params["b_p1"], params["w_p2"],
                params["b_p2"], params["wl_p"], params["bl_p"])
    cat = jnp.concatenate([vc, vp], axis=-1)
    out = jnp.dot(cat, params["w_out"][:400], precision=hp) + params["b_out"]
    return jnp.squeeze(out)


if __name__ == "__main__":
    key = jax.random.PRNGKey(0)
    kp, kc, kq = jax.random.split(key, 3)
    params = make_params(kp)
    # Smallest input shapes consistent with the module's hard-coded Linear
    # in_features: context flattens to 6*62 -> (B, 32, 256); persona flattens
    # to 6*56 -> (B, 32, 232).
    x_ctx = jax.random.normal(kc, (2, 32, 256), jnp.float32)
    x_per = jax.random.normal(kq, (2, 32, 232), jnp.float32)

    out = jax.jit(cnn_block_forward)(x_ctx, x_per, params)
    out = jax.block_until_ready(out)
    assert out.shape == (2,), out.shape

    ref = reference_forward(x_ctx, x_per, params)
    err = float(jnp.max(jnp.abs(out - ref)))
    assert err < 5e-2, f"max abs error vs reference: {err}"
    print("KERNEL_OK")
</pallas_src>

<mosaic_0001>
module attributes {stable_mosaic.version = 11 : i64} {
  func.func @_fused_kernel(%arg0: i32, %arg1: memref<64x256xbf16, #tpu.memory_space<vmem>>, %arg2: memref<64x256xbf16, #tpu.memory_space<vmem>>, %arg3: memref<64x256xf32, #tpu.memory_space<vmem>>, %arg4: memref<64x256xf32, #tpu.memory_space<vmem>>, %arg5: memref<2x64xf32, #tpu.memory_space<vmem>>, %arg6: memref<9xf32, #tpu.memory_space<smem>>, %arg7: memref<9xf32, #tpu.memory_space<smem>>, %arg8: memref<9xf32, #tpu.memory_space<smem>>, %arg9: memref<9xf32, #tpu.memory_space<smem>>, %arg10: memref<5xf32, #tpu.memory_space<smem>>, %arg11: memref<2x128xf32, #tpu.memory_space<vmem>>) attributes {dimension_semantics = [#tpu.dimension_semantics<parallel>], iteration_bounds = array<i64: 1>, scalar_prefetch = 0 : i64, scratch_operands = 0 : i64, tpu.core_type = #tpu.core_type<tc>, window_params = [{transform_indices = @transform_0, window_bounds = array<i64: 64, 256>}, {transform_indices = @transform_1, window_bounds = array<i64: 64, 256>}, {pipeline_mode = #tpu.pipeline_mode<synchronous>, transform_indices = @transform_2, window_bounds = array<i64: 64, 256>}, {pipeline_mode = #tpu.pipeline_mode<synchronous>, transform_indices = @transform_3, window_bounds = array<i64: 64, 256>}, {pipeline_mode = #tpu.pipeline_mode<synchronous>, transform_indices = @transform_4, window_bounds = array<i64: 2, 64>}, {transform_indices = @transform_5, window_bounds = array<i64: 9>}, {transform_indices = @transform_6, window_bounds = array<i64: 9>}, {transform_indices = @transform_7, window_bounds = array<i64: 9>}, {transform_indices = @transform_8, window_bounds = array<i64: 9>}, {transform_indices = @transform_9, window_bounds = array<i64: 5>}, {transform_indices = @transform_10, window_bounds = array<i64: 2, 128>}]} {
    %c0 = arith.constant 0 : index
    %c0_0 = arith.constant 0 : index
    %0 = vector.load %arg1[%c0, %c0_0] : memref<64x256xbf16, #tpu.memory_space<vmem>>, vector<64x256xbf16>
    %1 = arith.extf %0 : vector<64x256xbf16> to vector<64x256xf32>
    %c0_1 = arith.constant 0 : index
    %c0_2 = arith.constant 0 : index
    %2 = vector.load %arg2[%c0_1, %c0_2] : memref<64x256xbf16, #tpu.memory_space<vmem>>, vector<64x256xbf16>
    %3 = arith.extf %2 : vector<64x256xbf16> to vector<64x256xf32>
    %c0_3 = arith.constant 0 : index
    %4 = memref.load %arg10[%c0_3] : memref<5xf32, #tpu.memory_space<smem>>
    %c1 = arith.constant 1 : index
    %5 = memref.load %arg10[%c1] : memref<5xf32, #tpu.memory_space<smem>>
    %c63_i32 = arith.constant 63 : i32
    %6 = tpu.dynamic_rotate %1 by %c63_i32 dim 0 : vector<64x256xf32>, i32 -> vector<64x256xf32>
    %c62_i32 = arith.constant 62 : i32
    %7 = tpu.dynamic_rotate %1 by %c62_i32 dim 0 : vector<64x256xf32>, i32 -> vector<64x256xf32>
    %c0_4 = arith.constant 0 : index
    %8 = memref.load %arg6[%c0_4] : memref<9xf32, #tpu.memory_space<smem>>
    %9 = vector.broadcast %8 : f32 to vector<64x256xf32>
    %10 = arith.mulf %9, %1 : vector<64x256xf32>
    %c3 = arith.constant 3 : index
    %11 = memref.load %arg6[%c3] : memref<9xf32, #tpu.memory_space<smem>>
    %12 = vector.broadcast %11 : f32 to vector<64x256xf32>
    %13 = arith.mulf %12, %6 : vector<64x256xf32>
    %14 = arith.addf %10, %13 : vector<64x256xf32>
    %c6 = arith.constant 6 : index
    %15 = memref.load %arg6[%c6] : memref<9xf32, #tpu.memory_space<smem>>
    %16 = vector.broadcast %15 : f32 to vector<64x256xf32>
    %17 = arith.mulf %16, %7 : vector<64x256xf32>
    %18 = arith.addf %14, %17 : vector<64x256xf32>
    %19 = vector.broadcast %4 : f32 to vector<64x256xf32>
    %20 = arith.addf %18, %19 : vector<64x256xf32>
    %c1_5 = arith.constant 1 : index
    %21 = memref.load %arg6[%c1_5] : memref<9xf32, #tpu.memory_space<smem>>
    %22 = vector.broadcast %21 : f32 to vector<64x256xf32>
    %23 = arith.mulf %22, %1 : vector<64x256xf32>
    %c4 = arith.constant 4 : index
    %24 = memref.load %arg6[%c4] : memref<9xf32, #tpu.memory_space<smem>>
    %25 = vector.broadcast %24 : f32 to vector<64x256xf32>
    %26 = arith.mulf %25, %6 : vector<64x256xf32>
    %27 = arith.addf %23, %26 : vector<64x256xf32>
    %c7 = arith.constant 7 : index
    %28 = memref.load %arg6[%c7] : memref<9xf32, #tpu.memory_space<smem>>
    %29 = vector.broadcast %28 : f32 to vector<64x256xf32>
    %30 = arith.mulf %29, %7 : vector<64x256xf32>
    %31 = arith.addf %27, %30 : vector<64x256xf32>
    %c255_i32 = arith.constant 255 : i32
    %32 = tpu.dynamic_rotate %31 by %c255_i32 dim 1 : vector<64x256xf32>, i32 -> vector<64x256xf32>
    %33 = arith.addf %20, %32 : vector<64x256xf32>
    %c2 = arith.constant 2 : index
    %34 = memref.load %arg6[%c2] : memref<9xf32, #tpu.memory_space<smem>>
    %35 = vector.broadcast %34 : f32 to vector<64x256xf32>
    %36 = arith.mulf %35, %1 : vector<64x256xf32>
    %c5 = arith.constant 5 : index
    %37 = memref.load %arg6[%c5] : memref<9xf32, #tpu.memory_space<smem>>
    %38 = vector.broadcast %37 : f32 to vector<64x256xf32>
    %39 = arith.mulf %38, %6 : vector<64x256xf32>
    %40 = arith.addf %36, %39 : vector<64x256xf32>
    %c8 = arith.constant 8 : index
    %41 = memref.load %arg6[%c8] : memref<9xf32, #tpu.memory_space<smem>>
    %42 = vector.broadcast %41 : f32 to vector<64x256xf32>
    %43 = arith.mulf %42, %7 : vector<64x256xf32>
    %44 = arith.addf %40, %43 : vector<64x256xf32>
    %c254_i32 = arith.constant 254 : i32
    %45 = tpu.dynamic_rotate %44 by %c254_i32 dim 1 : vector<64x256xf32>, i32 -> vector<64x256xf32>
    %46 = arith.addf %33, %45 : vector<64x256xf32>
    %c255_i32_6 = arith.constant 255 : i32
    %47 = tpu.dynamic_rotate %46 by %c255_i32_6 dim 1 : vector<64x256xf32>, i32 -> vector<64x256xf32>
    %48 = arith.maximumf %46, %47 : vector<64x256xf32>
    %c63_i32_7 = arith.constant 63 : i32
    %49 = tpu.dynamic_rotate %48 by %c63_i32_7 dim 0 : vector<64x256xf32>, i32 -> vector<64x256xf32>
    %50 = arith.maximumf %48, %49 : vector<64x256xf32>
    %cst = arith.constant 0.000000e+00 : f32
    %51 = vector.broadcast %cst : f32 to vector<64x256xf32>
    %52 = arith.maximumf %50, %51 : vector<64x256xf32>
    %c62_i32_8 = arith.constant 62 : i32
    %53 = tpu.dynamic_rotate %52 by %c62_i32_8 dim 0 : vector<64x256xf32>, i32 -> vector<64x256xf32>
    %c60_i32 = arith.constant 60 : i32
    %54 = tpu.dynamic_rotate %52 by %c60_i32 dim 0 : vector<64x256xf32>, i32 -> vector<64x256xf32>
    %c0_9 = arith.constant 0 : index
    %55 = memref.load %arg7[%c0_9] : memref<9xf32, #tpu.memory_space<smem>>
    %56 = vector.broadcast %55 : f32 to vector<64x256xf32>
    %57 = arith.mulf %56, %52 : vector<64x256xf32>
    %c3_10 = arith.constant 3 : index
    %58 = memref.load %arg7[%c3_10] : memref<9xf32, #tpu.memory_space<smem>>
    %59 = vector.broadcast %58 : f32 to vector<64x256xf32>
    %60 = arith.mulf %59, %53 : vector<64x256xf32>
    %61 = arith.addf %57, %60 : vector<64x256xf32>
    %c6_11 = arith.constant 6 : index
    %62 = memref.load %arg7[%c6_11] : memref<9xf32, #tpu.memory_space<smem>>
    %63 = vector.broadcast %62 : f32 to vector<64x256xf32>
    %64 = arith.mulf %63, %54 : vector<64x256xf32>
    %65 = arith.addf %61, %64 : vector<64x256xf32>
    %66 = vector.broadcast %5 : f32 to vector<64x256xf32>
    %67 = arith.addf %65, %66 : vector<64x256xf32>
    %c1_12 = arith.constant 1 : index
    %68 = memref.load %arg7[%c1_12] : memref<9xf32, #tpu.memory_space<smem>>
    %69 = vector.broadcast %68 : f32 to vector<64x256xf32>
    %70 = arith.mulf %69, %52 : vector<64x256xf32>
    %c4_13 = arith.constant 4 : index
    %71 = memref.load %arg7[%c4_13] : memref<9xf32, #tpu.memory_space<smem>>
    %72 = vector.broadcast %71 : f32 to vector<64x256xf32>
    %73 = arith.mulf %72, %53 : vector<64x256xf32>
    %74 = arith.addf %70, %73 : vector<64x256xf32>
    %c7_14 = arith.constant 7 : index
    %75 = memref.load %arg7[%c7_14] : memref<9xf32, #tpu.memory_space<smem>>
    %76 = vector.broadcast %75 : f32 to vector<64x256xf32>
    %77 = arith.mulf %76, %54 : vector<64x256xf32>
    %78 = arith.addf %74, %77 : vector<64x256xf32>
    %c254_i32_15 = arith.constant 254 : i32
    %79 = tpu.dynamic_rotate %78 by %c254_i32_15 dim 1 : vector<64x256xf32>, i32 -> vector<64x256xf32>
    %80 = arith.addf %67, %79 : vector<64x256xf32>
    %c2_16 = arith.constant 2 : index
    %81 = memref.load %arg7[%c2_16] : memref<9xf32, #tpu.memory_space<smem>>
    %82 = vector.broadcast %81 : f32 to vector<64x256xf32>
    %83 = arith.mulf %82, %52 : vector<64x256xf32>
    %c5_17 = arith.constant 5 : index
    %84 = memref.load %arg7[%c5_17] : memref<9xf32, #tpu.memory_space<smem>>
    %85 = vector.broadcast %84 : f32 to vector<64x256xf32>
    %86 = arith.mulf %85, %53 : vector<64x256xf32>
    %87 = arith.addf %83, %86 : vector<64x256xf32>
    %c8_18 = arith.constant 8 : index
    %88 = memref.load %arg7[%c8_18] : memref<9xf32, #tpu.memory_space<smem>>
    %89 = vector.broadcast %88 : f32 to vector<64x256xf32>
    %90 = arith.mulf %89, %54 : vector<64x256xf32>
    %91 = arith.addf %87, %90 : vector<64x256xf32>
    %c252_i32 = arith.constant 252 : i32
    %92 = tpu.dynamic_rotate %91 by %c252_i32 dim 1 : vector<64x256xf32>, i32 -> vector<64x256xf32>
    %93 = arith.addf %80, %92 : vector<64x256xf32>
    %c254_i32_19 = arith.constant 254 : i32
    %94 = tpu.dynamic_rotate %93 by %c254_i32_19 dim 1 : vector<64x256xf32>, i32 -> vector<64x256xf32>
    %95 = arith.maximumf %93, %94 : vector<64x256xf32>
    %c62_i32_20 = arith.constant 62 : i32
    %96 = tpu.dynamic_rotate %95 by %c62_i32_20 dim 0 : vector<64x256xf32>, i32 -> vector<64x256xf32>
    %97 = arith.maximumf %95, %96 : vector<64x256xf32>
    %cst_21 = arith.constant 0.000000e+00 : f32
    %98 = vector.broadcast %cst_21 : f32 to vector<64x256xf32>
    %99 = arith.maximumf %97, %98 : vector<64x256xf32>
    %c2_22 = arith.constant 2 : index
    %100 = memref.load %arg10[%c2_22] : memref<5xf32, #tpu.memory_space<smem>>
    %c3_23 = arith.constant 3 : index
    %101 = memref.load %arg10[%c3_23] : memref<5xf32, #tpu.memory_space<smem>>
    %c63_i32_24 = arith.constant 63 : i32
    %102 = tpu.dynamic_rotate %3 by %c63_i32_24 dim 0 : vector<64x256xf32>, i32 -> vector<64x256xf32>
    %c62_i32_25 = arith.constant 62 : i32
    %103 = tpu.dynamic_rotate %3 by %c62_i32_25 dim 0 : vector<64x256xf32>, i32 -> vector<64x256xf32>
    %c0_26 = arith.constant 0 : index
    %104 = memref.load %arg8[%c0_26] : memref<9xf32, #tpu.memory_space<smem>>
    %105 = vector.broadcast %104 : f32 to vector<64x256xf32>
    %106 = arith.mulf %105, %3 : vector<64x256xf32>
    %c3_27 = arith.constant 3 : index
    %107 = memref.load %arg8[%c3_27] : memref<9xf32, #tpu.memory_space<smem>>
    %108 = vector.broadcast %107 : f32 to vector<64x256xf32>
    %109 = arith.mulf %108, %102 : vector<64x256xf32>
    %110 = arith.addf %106, %109 : vector<64x256xf32>
    %c6_28 = arith.constant 6 : index
    %111 = memref.load %arg8[%c6_28] : memref<9xf32, #tpu.memory_space<smem>>
    %112 = vector.broadcast %111 : f32 to vector<64x256xf32>
    %113 = arith.mulf %112, %103 : vector<64x256xf32>
    %114 = arith.addf %110, %113 : vector<64x256xf32>
    %115 = vector.broadcast %100 : f32 to vector<64x256xf32>
    %116 = arith.addf %114, %115 : vector<64x256xf32>
    %c1_29 = arith.constant 1 : index
    %117 = memref.load %arg8[%c1_29] : memref<9xf32, #tpu.memory_space<smem>>
    %118 = vector.broadcast %117 : f32 to vector<64x256xf32>
    %119 = arith.mulf %118, %3 : vector<64x256xf32>
    %c4_30 = arith.constant 4 : index
    %120 = memref.load %arg8[%c4_30] : memref<9xf32, #tpu.memory_space<smem>>
    %121 = vector.broadcast %120 : f32 to vector<64x256xf32>
    %122 = arith.mulf %121, %102 : vector<64x256xf32>
    %123 = arith.addf %119, %122 : vector<64x256xf32>
    %c7_31 = arith.constant 7 : index
    %124 = memref.load %arg8[%c7_31] : memref<9xf32, #tpu.memory_space<smem>>
    %125 = vector.broadcast %124 : f32 to vector<64x256xf32>
    %126 = arith.mulf %125, %103 : vector<64x256xf32>
    %127 = arith.addf %123, %126 : vector<64x256xf32>
    %c255_i32_32 = arith.constant 255 : i32
    %128 = tpu.dynamic_rotate %127 by %c255_i32_32 dim 1 : vector<64x256xf32>, i32 -> vector<64x256xf32>
    %129 = arith.addf %116, %128 : vector<64x256xf32>
    %c2_33 = arith.constant 2 : index
    %130 = memref.load %arg8[%c2_33] : memref<9xf32, #tpu.memory_space<smem>>
    %131 = vector.broadcast %130 : f32 to vector<64x256xf32>
    %132 = arith.mulf %131, %3 : vector<64x256xf32>
    %c5_34 = arith.constant 5 : index
    %133 = memref.load %arg8[%c5_34] : memref<9xf32, #tpu.memory_space<smem>>
    %134 = vector.broadcast %133 : f32 to vector<64x256xf32>
    %135 = arith.mulf %134, %102 : vector<64x256xf32>
    %136 = arith.addf %132, %135 : vector<64x256xf32>
    %c8_35 = arith.constant 8 : index
    %137 = memref.load %arg8[%c8_35] : memref<9xf32, #tpu.memory_space<smem>>
    %138 = vector.broadcast %137 : f32 to vector<64x256xf32>
    %139 = arith.mulf %138, %103 : vector<64x256xf32>
    %140 = arith.addf %136, %139 : vector<64x256xf32>
    %c254_i32_36 = arith.constant 254 : i32
    %141 = tpu.dynamic_rotate %140 by %c254_i32_36 dim 1 : vector<64x256xf32>, i32 -> vector<64x256xf32>
    %142 = arith.addf %129, %141 : vector<64x256xf32>
    %c255_i32_37 = arith.constant 255 : i32
    %143 = tpu.dynamic_rotate %142 by %c255_i32_37 dim 1 : vector<64x256xf32>, i32 -> vector<64x256xf32>
    %144 = arith.maximumf %142, %143 : vector<64x256xf32>
    %c63_i32_38 = arith.constant 63 : i32
    %145 = tpu.dynamic_rotate %144 by %c63_i32_38 dim 0 : vector<64x256xf32>, i32 -> vector<64x256xf32>
    %146 = arith.maximumf %144, %145 : vector<64x256xf32>
    %cst_39 = arith.constant 0.000000e+00 : f32
    %147 = vector.broadcast %cst_39 : f32 to vector<64x256xf32>
    %148 = arith.maximumf %146, %147 : vector<64x256xf32>
    %c62_i32_40 = arith.constant 62 : i32
    %149 = tpu.dynamic_rotate %148 by %c62_i32_40 dim 0 : vector<64x256xf32>, i32 -> vector<64x256xf32>
    %c60_i32_41 = arith.constant 60 : i32
    %150 = tpu.dynamic_rotate %148 by %c60_i32_41 dim 0 : vector<64x256xf32>, i32 -> vector<64x256xf32>
    %c0_42 = arith.constant 0 : index
    %151 = memref.load %arg9[%c0_42] : memref<9xf32, #tpu.memory_space<smem>>
    %152 = vector.broadcast %151 : f32 to vector<64x256xf32>
    %153 = arith.mulf %152, %148 : vector<64x256xf32>
    %c3_43 = arith.constant 3 : index
    %154 = memref.load %arg9[%c3_43] : memref<9xf32, #tpu.memory_space<smem>>
    %155 = vector.broadcast %154 : f32 to vector<64x256xf32>
    %156 = arith.mulf %155, %149 : vector<64x256xf32>
    %157 = arith.addf %153, %156 : vector<64x256xf32>
    %c6_44 = arith.constant 6 : index
    %158 = memref.load %arg9[%c6_44] : memref<9xf32, #tpu.memory_space<smem>>
    %159 = vector.broadcast %158 : f32 to vector<64x256xf32>
    %160 = arith.mulf %159, %150 : vector<64x256xf32>
    %161 = arith.addf %157, %160 : vector<64x256xf32>
    %162 = vector.broadcast %101 : f32 to vector<64x256xf32>
    %163 = arith.addf %161, %162 : vector<64x256xf32>
    %c1_45 = arith.constant 1 : index
    %164 = memref.load %arg9[%c1_45] : memref<9xf32, #tpu.memory_space<smem>>
    %165 = vector.broadcast %164 : f32 to vector<64x256xf32>
    %166 = arith.mulf %165, %148 : vector<64x256xf32>
    %c4_46 = arith.constant 4 : index
    %167 = memref.load %arg9[%c4_46] : memref<9xf32, #tpu.memory_space<smem>>
    %168 = vector.broadcast %167 : f32 to vector<64x256xf32>
    %169 = arith.mulf %168, %149 : vector<64x256xf32>
    %170 = arith.addf %166, %169 : vector<64x256xf32>
    %c7_47 = arith.constant 7 : index
    %171 = memref.load %arg9[%c7_47] : memref<9xf32, #tpu.memory_space<smem>>
    %172 = vector.broadcast %171 : f32 to vector<64x256xf32>
    %173 = arith.mulf %172, %150 : vector<64x256xf32>
    %174 = arith.addf %170, %173 : vector<64x256xf32>
    %c254_i32_48 = arith.constant 254 : i32
    %175 = tpu.dynamic_rotate %174 by %c254_i32_48 dim 1 : vector<64x256xf32>, i32 -> vector<64x256xf32>
    %176 = arith.addf %163, %175 : vector<64x256xf32>
    %c2_49 = arith.constant 2 : index
    %177 = memref.load %arg9[%c2_49] : memref<9xf32, #tpu.memory_space<smem>>
    %178 = vector.broadcast %177 : f32 to vector<64x256xf32>
    %179 = arith.mulf %178, %148 : vector<64x256xf32>
    %c5_50 = arith.constant 5 : index
    %180 = memref.load %arg9[%c5_50] : memref<9xf32, #tpu.memory_space<smem>>
    %181 = vector.broadcast %180 : f32 to vector<64x256xf32>
    %182 = arith.mulf %181, %149 : vector<64x256xf32>
    %183 = arith.addf %179, %182 : vector<64x256xf32>
    %c8_51 = arith.constant 8 : index
    %184 = memref.load %arg9[%c8_51] : memref<9xf32, #tpu.memory_space<smem>>
    %185 = vector.broadcast %184 : f32 to vector<64x256xf32>
    %186 = arith.mulf %185, %150 : vector<64x256xf32>
    %187 = arith.addf %183, %186 : vector<64x256xf32>
    %c252_i32_52 = arith.constant 252 : i32
    %188 = tpu.dynamic_rotate %187 by %c252_i32_52 dim 1 : vector<64x256xf32>, i32 -> vector<64x256xf32>
    %189 = arith.addf %176, %188 : vector<64x256xf32>
    %c254_i32_53 = arith.constant 254 : i32
    %190 = tpu.dynamic_rotate %189 by %c254_i32_53 dim 1 : vector<64x256xf32>, i32 -> vector<64x256xf32>
    %191 = arith.maximumf %189, %190 : vector<64x256xf32>
    %c62_i32_54 = arith.constant 62 : i32
    %192 = tpu.dynamic_rotate %191 by %c62_i32_54 dim 0 : vector<64x256xf32>, i32 -> vector<64x256xf32>
    %193 = arith.maximumf %191, %192 : vector<64x256xf32>
    %cst_55 = arith.constant 0.000000e+00 : f32
    %194 = vector.broadcast %cst_55 : f32 to vector<64x256xf32>
    %195 = arith.maximumf %193, %194 : vector<64x256xf32>
    %c0_56 = arith.constant 0 : index
    %c0_57 = arith.constant 0 : index
    %196 = vector.load %arg3[%c0_56, %c0_57] : memref<64x256xf32, #tpu.memory_space<vmem>>, vector<64x256xf32>
    %197 = arith.mulf %99, %196 : vector<64x256xf32>
    %c0_58 = arith.constant 0 : index
    %c0_59 = arith.constant 0 : index
    %198 = vector.load %arg4[%c0_58, %c0_59] : memref<64x256xf32, #tpu.memory_space<vmem>>, vector<64x256xf32>
    %199 = arith.mulf %195, %198 : vector<64x256xf32>
    %200 = arith.addf %197, %199 : vector<64x256xf32>
    %c0_60 = arith.constant 0 : index
    %c0_61 = arith.constant 0 : index
    %201 = vector.load %arg5[%c0_60, %c0_61] : memref<2x64xf32, #tpu.memory_space<vmem>>, vector<2x64xf32>
    %cst_62 = arith.constant dense<0.000000e+00> : vector<2x256xf32>
    %202 = tpu.matmul %201, %200, %cst_62 {dimension_numbers = #tpu.dot_dimension_numbers<[1], [0], [0], [1], [0, 0, 1, 1], [], []>} : vector<2x64xf32>, vector<64x256xf32>, vector<2x256xf32> -> vector<2x256xf32>
    %cst_63 = arith.constant dense<0.000000e+00> : vector<2xf32>
    %203 = vector.multi_reduction <add>, %202, %cst_63 [1] : vector<2x256xf32> to vector<2xf32>
    %204 = vector.shape_cast %203 : vector<2xf32> to vector<2x1xf32>
    %c4_64 = arith.constant 4 : index
    %205 = memref.load %arg10[%c4_64] : memref<5xf32, #tpu.memory_space<smem>>
    %206 = vector.broadcast %205 : f32 to vector<2x1xf32>
    %207 = arith.addf %204, %206 : vector<2x1xf32>
    %208 = vector.shape_cast %207 : vector<2x1xf32> to vector<2x1xf32>
    %209 = vector.broadcast %208 : vector<2x1xf32> to vector<2x128xf32>
    %c0_65 = arith.constant 0 : index
    %c0_66 = arith.constant 0 : index
    %210 = vector.load %arg11[%c0_65, %c0_66] : memref<2x128xf32, #tpu.memory_space<vmem>>, vector<2x128xf32>
    tpu.vector_store %arg11[%c0_65, %c0_66], %209 {strides = array<i32>} : memref<2x128xf32, #tpu.memory_space<vmem>>, vector<2x128xf32>,
    return
  }
  func.func @transform_0(%arg0: i32) -> (i32, i32) {
    %c0_i32 = arith.constant 0 : i32
    %c0_i32_0 = arith.constant 0 : i32
    return %arg0, %c0_i32 : i32, i32
  }
  func.func @transform_1(%arg0: i32) -> (i32, i32) {
    %c0_i32 = arith.constant 0 : i32
    %c0_i32_0 = arith.constant 0 : i32
    return %arg0, %c0_i32 : i32, i32
  }
  func.func @transform_2(%arg0: i32) -> (i32, i32) {
    %c0_i32 = arith.constant 0 : i32
    %c0_i32_0 = arith.constant 0 : i32
    %c0_i32_1 = arith.constant 0 : i32
    return %c0_i32, %c0_i32_0 : i32, i32
  }
  func.func @transform_3(%arg0: i32) -> (i32, i32) {
    %c0_i32 = arith.constant 0 : i32
    %c0_i32_0 = arith.constant 0 : i32
    %c0_i32_1 = arith.constant 0 : i32
    return %c0_i32, %c0_i32_0 : i32, i32
  }
  func.func @transform_4(%arg0: i32) -> (i32, i32) {
    %c0_i32 = arith.constant 0 : i32
    %c0_i32_0 = arith.constant 0 : i32
    %c0_i32_1 = arith.constant 0 : i32
    return %c0_i32, %c0_i32_0 : i32, i32
  }
  func.func @transform_5(%arg0: i32) -> i32 {
    %c0_i32 = arith.constant 0 : i32
    %c0_i32_0 = arith.constant 0 : i32
    return %c0_i32 : i32
  }
  func.func @transform_6(%arg0: i32) -> i32 {
    %c0_i32 = arith.constant 0 : i32
    %c0_i32_0 = arith.constant 0 : i32
    return %c0_i32 : i32
  }
  func.func @transform_7(%arg0: i32) -> i32 {
    %c0_i32 = arith.constant 0 : i32
    %c0_i32_0 = arith.constant 0 : i32
    return %c0_i32 : i32
  }
  func.func @transform_8(%arg0: i32) -> i32 {
    %c0_i32 = arith.constant 0 : i32
    %c0_i32_0 = arith.constant 0 : i32
    return %c0_i32 : i32
  }
  func.func @transform_9(%arg0: i32) -> i32 {
    %c0_i32 = arith.constant 0 : i32
    %c0_i32_0 = arith.constant 0 : i32
    return %c0_i32 : i32
  }
  func.func @transform_10(%arg0: i32) -> (i32, i32) {
    %c0_i32 = arith.constant 0 : i32
    %c0_i32_0 = arith.constant 0 : i32
    return %arg0, %c0_i32 : i32, i32
  }
}

</mosaic_0001>

<llo_original>
// kernel: cnn_block_forward.1
$region0: #{cnn_block_forward.1}
  #allocation0 [shape = 'u32[]', space=smem, size = 0x4, offset = 0x4, fixed_abs, tag = 'smem constant byte address 0x4 - core index']
  #allocation1 [shape = 'u32[144,128]{1,0:T(1,128)}', space=vmem, size = 0x12000, scoped, tag = 'internal scratch']
  %s0 = inlined_call_operand.vmem [shape: bf16[64,256], index: 0, kind: input, shape index: {}]
  %s1 = inlined_call_operand.vmem [shape: bf16[64,256], index: 1, kind: input, shape index: {}]
  %s2 = inlined_call_operand.vmem [shape: f32[64,256], index: 2, kind: input, shape index: {}]
  %s3 = inlined_call_operand.vmem [shape: f32[64,256], index: 3, kind: input, shape index: {}]
  %s4 = inlined_call_operand.vmem [shape: f32[2,64], index: 4, kind: input, shape index: {}]
  %s5 = inlined_call_operand.vmem [shape: f32[9], index: 5, kind: input, shape index: {}]
  %s6 = inlined_call_operand.vmem [shape: f32[9], index: 6, kind: input, shape index: {}]
  %s7 = inlined_call_operand.vmem [shape: f32[9], index: 7, kind: input, shape index: {}]
  %s8 = inlined_call_operand.vmem [shape: f32[9], index: 8, kind: input, shape index: {}]
  %s9 = inlined_call_operand.vmem [shape: f32[5], index: 9, kind: input, shape index: {}]
  %s10 = inlined_call_operand.vmem [shape: f32[2,128], index: 10, kind: output, shape index: {}]
  %s11 = sld [smem:[#allocation0]]
  $region70: #{cnn_block_forward.1} parent=0
    _
  %s13 = ssub.s32 1, %s11
  %s14 = scalar_select 0, %s13, %s11
  $region1: #{cnn_block_forward.1} parent=0
    #allocation2 [shape = 'u8[512]{0}', space=smem, size = 0x200, scoped, tag = 'input window, operand 5, single buffered']
    #allocation3 [shape = 's32[1]{0}', space=sflag, size = 0x4, scoped, tag = 'scoped memory for cnn_block_forward.1']
    #allocation4 [shape = 'u8[512]{0}', space=smem, size = 0x200, scoped, tag = 'input window, operand 6, single buffered']
    #allocation5 [shape = 's32[1]{0}', space=sflag, size = 0x4, scoped, tag = 'scoped memory for cnn_block_forward.1']
    #allocation6 [shape = 'u8[512]{0}', space=smem, size = 0x200, scoped, tag = 'input window, operand 7, single buffered']
    #allocation7 [shape = 'u8[512]{0}', space=smem, size = 0x200, scoped, tag = 'input window, operand 8, single buffered']
    #allocation8 [shape = 's32[1]{0}', space=sflag, size = 0x4, scoped, tag = 'scoped memory for cnn_block_forward.1']
    #allocation9 [shape = 'u8[512]{0}', space=smem, size = 0x200, scoped, tag = 'input window, operand 9, single buffered']
    %15 = vsyncpa [#allocation3], 0
    %16 = vsyncpa [#allocation5], 0
    %17 = vsyncpa [#allocation8], 0
    // Predicated region
    $region2: #{cnn_block_forward.1} parent=1 // pred_check
      _
    $region3: #{cnn_block_forward.1} parent=1 // pred_check_branch
      %19 = sbr.rel (0) target = $region5
    $region4: #{cnn_block_forward.1} parent=1 // pred_region
      _
    $region5: #{cnn_block_forward.1} parent=1 // pred_fallthru
      _
    // Predicated region
    $region6: #{cnn_block_forward.1} parent=1 // pred_check
      _
    $region7: #{cnn_block_forward.1} parent=1 // pred_check_branch
      %21 = sbr.rel (0) target = $region9
    $region8: #{cnn_block_forward.1} parent=1 // pred_region
      _
    $region9: #{cnn_block_forward.1} parent=1 // pred_fallthru
      _
    // Predicated region
    $region10: #{cnn_block_forward.1} parent=1 // pred_check
      _
    $region11: #{cnn_block_forward.1} parent=1 // pred_check_branch
      %23 = sbr.rel (0) target = $region13
    $region12: #{cnn_block_forward.1} parent=1 // pred_region
      _
    $region13: #{cnn_block_forward.1} parent=1 // pred_fallthru
      _
    // Predicated region
    $region14: #{cnn_block_forward.1} parent=1 // pred_check
      _
    $region15: #{cnn_block_forward.1} parent=1 // pred_check_branch
      %25 = sbr.rel (0) target = $region17
    $region16: #{cnn_block_forward.1} parent=1 // pred_region
      _
    $region17: #{cnn_block_forward.1} parent=1 // pred_fallthru
      _
    // Predicated region
    $region18: #{cnn_block_forward.1} parent=1 // pred_check
      _
    $region19: #{cnn_block_forward.1} parent=1 // pred_check_branch
      %27 = sbr.rel (0) target = $region21
    $region20: #{cnn_block_forward.1} parent=1 // pred_region
      _
    $region21: #{cnn_block_forward.1} parent=1 // pred_fallthru
      _
    // Predicated region
    $region22: #{cnn_block_forward.1} parent=1 // pred_check
      _
    $region23: #{cnn_block_forward.1} parent=1 // pred_check_branch
      %29 = sbr.rel (0) target = $region25
    $region24: #{cnn_block_forward.1} parent=1 // pred_region
      %s31 = ssub.s32 16, 16
      %32 = vsyncadd [#allocation3], %s31
      %s34 = sshll.u32 %s5, 4
      %s35 = int_to_ptr.vmem [resolvable:$true] %s34
      %37 = dma.vmem_to_smem %s35, 16, [#allocation2], [#allocation3]
    $region25: #{cnn_block_forward.1} parent=1 // pred_fallthru
      _
    // Predicated region
    $region26: #{cnn_block_forward.1} parent=1 // pred_check
      _
    $region27: #{cnn_block_forward.1} parent=1 // pred_check_branch
      %39 = sbr.rel (0) target = $region29
    $region28: #{cnn_block_forward.1} parent=1 // pred_region
      %s41 = ssub.s32 16, 16
      %42 = vsyncadd [#allocation5], %s41
      %s44 = sshll.u32 %s6, 4
      %s45 = int_to_ptr.vmem [resolvable:$true] %s44
      %47 = dma.vmem_to_smem %s45, 16, [#allocation4], [#allocation5]
    $region29: #{cnn_block_forward.1} parent=1 // pred_fallthru
      _
    // Predicated region
    $region30: #{cnn_block_forward.1} parent=1 // pred_check
      _
    $region31: #{cnn_block_forward.1} parent=1 // pred_check_branch
      %49 = sbr.rel (0) target = $region33
    $region32: #{cnn_block_forward.1} parent=1 // pred_region
      %s51 = ssub.s32 16, 16
      %52 = vsyncadd [#allocation5], %s51
      %s54 = sshll.u32 %s7, 4
      %s55 = int_to_ptr.vmem [resolvable:$true] %s54
      %57 = dma.vmem_to_smem %s55, 16, [#allocation6], [#allocation5]
    $region33: #{cnn_block_forward.1} parent=1 // pred_fallthru
      _
    // Predicated region
    $region34: #{cnn_block_forward.1} parent=1 // pred_check
      _
    $region35: #{cnn_block_forward.1} parent=1 // pred_check_branch
      %59 = sbr.rel (0) target = $region37
    $region36: #{cnn_block_forward.1} parent=1 // pred_region
      %s61 = ssub.s32 16, 16
      %62 = vsyncadd [#allocation8], %s61
      %s64 = sshll.u32 %s8, 4
      %s65 = int_to_ptr.vmem [resolvable:$true] %s64
      %67 = dma.vmem_to_smem %s65, 16, [#allocation7], [#allocation8]
    $region37: #{cnn_block_forward.1} parent=1 // pred_fallthru
      _
    // Predicated region
    $region38: #{cnn_block_forward.1} parent=1 // pred_check
      _
    $region39: #{cnn_block_forward.1} parent=1 // pred_check_branch
      %69 = sbr.rel (0) target = $region41
    $region40: #{cnn_block_forward.1} parent=1 // pred_region
      %s71 = ssub.s32 16, 16
      %72 = vsyncadd [#allocation8], %s71
      %s74 = sshll.u32 %s9, 4
      %s75 = int_to_ptr.vmem [resolvable:$true] %s74
      %77 = dma.vmem_to_smem %s75, 16, [#allocation9], [#allocation8]
    $region41: #{cnn_block_forward.1} parent=1 // pred_fallthru
      _
    // Predicated region
    $region42: #{cnn_block_forward.1} parent=1 // pred_check
      _
    $region43: #{cnn_block_forward.1} parent=1 // pred_check_branch
      %79 = sbr.rel (0) target = $region45
    $region44: #{cnn_block_forward.1} parent=1 // pred_region
      %80 = dma.done [#allocation3], 16
    $region45: #{cnn_block_forward.1} parent=1 // pred_fallthru
      _
    // Predicated region
    $region46: #{cnn_block_forward.1} parent=1 // pred_check
      _
    $region47: #{cnn_block_forward.1} parent=1 // pred_check_branch
      %82 = sbr.rel (0) target = $region49
    $region48: #{cnn_block_forward.1} parent=1 // pred_region
      %83 = dma.done [#allocation5], 16
    $region49: #{cnn_block_forward.1} parent=1 // pred_fallthru
      _
    // Predicated region
    $region50: #{cnn_block_forward.1} parent=1 // pred_check
      _
    $region51: #{cnn_block_forward.1} parent=1 // pred_check_branch
      %85 = sbr.rel (0) target = $region53
    $region52: #{cnn_block_forward.1} parent=1 // pred_region
      %86 = dma.done [#allocation5], 16
    $region53: #{cnn_block_forward.1} parent=1 // pred_fallthru
      _
    // Predicated region
    $region54: #{cnn_block_forward.1} parent=1 // pred_check
      _
    $region55: #{cnn_block_forward.1} parent=1 // pred_check_branch
      %88 = sbr.rel (0) target = $region57
    $region56: #{cnn_block_forward.1} parent=1 // pred_region
      %89 = dma.done [#allocation8], 16
    $region57: #{cnn_block_forward.1} parent=1 // pred_fallthru
      _
    // Predicated region
    $region58: #{cnn_block_forward.1} parent=1 // pred_check
      _
    $region59: #{cnn_block_forward.1} parent=1 // pred_check_branch
      %91 = sbr.rel (0) target = $region61
    $region60: #{cnn_block_forward.1} parent=1 // pred_region
      %92 = dma.done [#allocation8], 16
    $region61: #{cnn_block_forward.1} parent=1 // pred_fallthru
      _
    %93 = sfence
    %v94 = vld [vmem:[%s0] sm:$0xff]
    %v95 = vld [vmem:[%s0 + $0x8] sm:$0xff]
    %v96 = vld [vmem:[%s0 + $0x10] sm:$0xff]
    %v97 = vld [vmem:[%s0 + $0x18] sm:$0xff]
    %v98 = vld [vmem:[%s0 + $0x20] sm:$0xff]
    %v99 = vld [vmem:[%s0 + $0x28] sm:$0xff]
    %v100 = vld [vmem:[%s0 + $0x30] sm:$0xff]
    %v101 = vld [vmem:[%s0 + $0x38] sm:$0xff]
    %v102 = vunpack.c.l.bf16 %v94
    %v103 = vunpack.c.h.bf16 %v94
    %v104 = vunpack.c.l.bf16 %v95
    %v105 = vunpack.c.h.bf16 %v95
    %v106 = vunpack.c.l.bf16 %v96
    %v107 = vunpack.c.h.bf16 %v96
    %v108 = vunpack.c.l.bf16 %v97
    %v109 = vunpack.c.h.bf16 %v97
    %v110 = vunpack.c.l.bf16 %v98
    %v111 = vunpack.c.h.bf16 %v98
    %v112 = vunpack.c.l.bf16 %v99
    %v113 = vunpack.c.h.bf16 %v99
    %v114 = vunpack.c.l.bf16 %v100
    %v115 = vunpack.c.h.bf16 %v100
    %v116 = vunpack.c.l.bf16 %v101
    %v117 = vunpack.c.h.bf16 %v101
    %v118 = vld [vmem:[%s1] sm:$0xff]
    %v119 = vld [vmem:[%s1 + $0x8] sm:$0xff]
    %v120 = vld [vmem:[%s1 + $0x10] sm:$0xff]
    %v121 = vld [vmem:[%s1 + $0x18] sm:$0xff]
    %v122 = vld [vmem:[%s1 + $0x20] sm:$0xff]
    %v123 = vld [vmem:[%s1 + $0x28] sm:$0xff]
    %v124 = vld [vmem:[%s1 + $0x30] sm:$0xff]
    %v125 = vld [vmem:[%s1 + $0x38] sm:$0xff]
    %v126 = vunpack.c.l.bf16 %v118
    %v127 = vunpack.c.h.bf16 %v118
    %v128 = vunpack.c.l.bf16 %v119
    %v129 = vunpack.c.h.bf16 %v119
    %v130 = vunpack.c.l.bf16 %v120
    %v131 = vunpack.c.h.bf16 %v120
    %v132 = vunpack.c.l.bf16 %v121
    %v133 = vunpack.c.h.bf16 %v121
    %v134 = vunpack.c.l.bf16 %v122
    %v135 = vunpack.c.h.bf16 %v122
    %v136 = vunpack.c.l.bf16 %v123
    %v137 = vunpack.c.h.bf16 %v123
    %v138 = vunpack.c.l.bf16 %v124
    %v139 = vunpack.c.h.bf16 %v124
    %v140 = vunpack.c.l.bf16 %v125
    %v141 = vunpack.c.h.bf16 %v125
    %s142 = sld [smem:[#allocation9]]
    %s143 = sld [smem:[#allocation9 + $0x1]]
    %v144 = vrot.slane %v102, 1
    %v145 = vrot.slane %v103, 1
    %v146 = vrot.slane %v104, 1
    %v147 = vrot.slane %v105, 1
    %v148 = vrot.slane %v106, 1
    %v149 = vrot.slane %v107, 1
    %v150 = vrot.slane %v108, 1
    %v151 = vrot.slane %v109, 1
    %v152 = vrot.slane %v110, 1
    %v153 = vrot.slane %v111, 1
    %v154 = vrot.slane %v112, 1
    %v155 = vrot.slane %v113, 1
    %v156 = vrot.slane %v114, 1
    %v157 = vrot.slane %v115, 1
    %v158 = vrot.slane %v116, 1
    %v159 = vrot.slane %v117, 1
    %v160 = vlaneseq
    %v161 = vshrl.u32 %v160, 7
    %vm162 = vcmp.lt.s32.totalorder %v161, 7
    %v163 = vsel %vm162, %v156, %v158
    %v164 = vsel %vm162, %v157, %v159
    %v165 = vsel %vm162, %v154, %v156
    %v166 = vsel %vm162, %v155, %v157
    %v167 = vsel %vm162, %v152, %v154
    %v168 = vsel %vm162, %v153, %v155
    %v169 = vsel %vm162, %v150, %v152
    %v170 = vsel %vm162, %v151, %v153
    %v171 = vsel %vm162, %v148, %v150
    %v172 = vsel %vm162, %v149, %v151
    %v173 = vsel %vm162, %v146, %v148
    %v174 = vsel %vm162, %v147, %v149
    %v175 = vsel %vm162, %v144, %v146
    %v176 = vsel %vm162, %v145, %v147
    %v177 = vsel %vm162, %v158, %v144
    %v178 = vsel %vm162, %v159, %v145
    %v179 = vrot.slane %v102, 2
    %v180 = vrot.slane %v103, 2
    %v181 = vrot.slane %v104, 2
    %v182 = vrot.slane %v105, 2
    %v183 = vrot.slane %v106, 2
    %v184 = vrot.slane %v107, 2
    %v185 = vrot.slane %v108, 2
    %v186 = vrot.slane %v109, 2
    %v187 = vrot.slane %v110, 2
    %v188 = vrot.slane %v111, 2
    %v189 = vrot.slane %v112, 2
    %v190 = vrot.slane %v113, 2
    %v191 = vrot.slane %v114, 2
    %v192 = vrot.slane %v115, 2
    %v193 = vrot.slane %v116, 2
    %v194 = vrot.slane %v117, 2
    %vm195 = vcmp.lt.s32.totalorder %v161, 6
    %v196 = vsel %vm195, %v191, %v193
    %v197 = vsel %vm195, %v192, %v194
    %v198 = vsel %vm195, %v189, %v191
    %v199 = vsel %vm195, %v190, %v192
    %v200 = vsel %vm195, %v187, %v189
    %v201 = vsel %vm195, %v188, %v190
    %v202 = vsel %vm195, %v185, %v187
    %v203 = vsel %vm195, %v186, %v188
    %v204 = vsel %vm195, %v183, %v185
    %v205 = vsel %vm195, %v184, %v186
    %v206 = vsel %vm195, %v181, %v183
    %v207 = vsel %vm195, %v182, %v184
    %v208 = vsel %vm195, %v179, %v181
    %v209 = vsel %vm195, %v180, %v182
    %v210 = vsel %vm195, %v193, %v179
    %v211 = vsel %vm195, %v194, %v180
    %s212 = sld [smem:[#allocation2]]
    %v213 = vstv %s212
    %v214 = vmul.f32 %v213, %v102
    %v215 = vmul.f32 %v213, %v103
    %v216 = vmul.f32 %v213, %v104
    %v217 = vmul.f32 %v213, %v105
    %v218 = vmul.f32 %v213, %v106
    %v219 = vmul.f32 %v213, %v107
    %v220 = vmul.f32 %v213, %v108
    %v221 = vmul.f32 %v213, %v109
    %v222 = vmul.f32 %v213, %v110
    %v223 = vmul.f32 %v213, %v111
    %v224 = vmul.f32 %v213, %v112
    %v225 = vmul.f32 %v213, %v113
    %v226 = vmul.f32 %v213, %v114
    %v227 = vmul.f32 %v213, %v115
    %v228 = vmul.f32 %v213, %v116
    %v229 = vmul.f32 %v213, %v117
    %s230 = sld [smem:[#allocation2 + $0x3]]
    %v231 = vstv %s230
    %v232 = vmul.f32 %v231, %v175
    %v233 = vmul.f32 %v231, %v176
    %v234 = vmul.f32 %v231, %v173
    %v235 = vmul.f32 %v231, %v174
    %v236 = vmul.f32 %v231, %v171
    %v237 = vmul.f32 %v231, %v172
    %v238 = vmul.f32 %v231, %v169
    %v239 = vmul.f32 %v231, %v170
    %v240 = vmul.f32 %v231, %v167
    %v241 = vmul.f32 %v231, %v168
    %v242 = vmul.f32 %v231, %v165
    %v243 = vmul.f32 %v231, %v166
    %v244 = vmul.f32 %v231, %v163
    %v245 = vmul.f32 %v231, %v164
    %v246 = vmul.f32 %v231, %v177
    %v247 = vmul.f32 %v231, %v178
    %v248 = vadd.f32 %v214, %v232
    %v249 = vadd.f32 %v215, %v233
    %v250 = vadd.f32 %v216, %v234
    %v251 = vadd.f32 %v217, %v235
    %v252 = vadd.f32 %v218, %v236
    %v253 = vadd.f32 %v219, %v237
    %v254 = vadd.f32 %v220, %v238
    %v255 = vadd.f32 %v221, %v239
    %v256 = vadd.f32 %v222, %v240
    %v257 = vadd.f32 %v223, %v241
    %v258 = vadd.f32 %v224, %v242
    %v259 = vadd.f32 %v225, %v243
    %v260 = vadd.f32 %v226, %v244
    %v261 = vadd.f32 %v227, %v245
    %v262 = vadd.f32 %v228, %v246
    %v263 = vadd.f32 %v229, %v247
    %s264 = sld [smem:[#allocation2 + $0x6]]
    %v265 = vstv %s264
    %v266 = vmul.f32 %v265, %v208
    %v267 = vmul.f32 %v265, %v209
    %v268 = vmul.f32 %v265, %v206
    %v269 = vmul.f32 %v265, %v207
    %v270 = vmul.f32 %v265, %v204
    %v271 = vmul.f32 %v265, %v205
    %v272 = vmul.f32 %v265, %v202
    %v273 = vmul.f32 %v265, %v203
    %v274 = vmul.f32 %v265, %v200
    %v275 = vmul.f32 %v265, %v201
    %v276 = vmul.f32 %v265, %v198
    %v277 = vmul.f32 %v265, %v199
    %v278 = vmul.f32 %v265, %v196
    %v279 = vmul.f32 %v265, %v197
    %v280 = vmul.f32 %v265, %v210
    %v281 = vmul.f32 %v265, %v211
    %v282 = vadd.f32 %v248, %v266
    %v283 = vadd.f32 %v249, %v267
    %v284 = vadd.f32 %v250, %v268
    %v285 = vadd.f32 %v251, %v269
    %v286 = vadd.f32 %v252, %v270
    %v287 = vadd.f32 %v253, %v271
    %v288 = vadd.f32 %v254, %v272
    %v289 = vadd.f32 %v255, %v273
    %v290 = vadd.f32 %v256, %v274
    %v291 = vadd.f32 %v257, %v275
    %v292 = vadd.f32 %v258, %v276
    %v293 = vadd.f32 %v259, %v277
    %v294 = vadd.f32 %v260, %v278
    %v295 = vadd.f32 %v261, %v279
    %v296 = vadd.f32 %v262, %v280
    %v297 = vadd.f32 %v263, %v281
    %v298 = vstv %s142
    %v299 = vadd.f32 %v282, %v298
    %v300 = vadd.f32 %v283, %v298
    %v301 = vadd.f32 %v284, %v298
    %v302 = vadd.f32 %v285, %v298
    %v303 = vadd.f32 %v286, %v298
    %v304 = vadd.f32 %v287, %v298
    %v305 = vadd.f32 %v288, %v298
    %v306 = vadd.f32 %v289, %v298
    %v307 = vadd.f32 %v290, %v298
    %v308 = vadd.f32 %v291, %v298
    %v309 = vadd.f32 %v292, %v298
    %v310 = vadd.f32 %v293, %v298
    %v311 = vadd.f32 %v294, %v298
    %v312 = vadd.f32 %v295, %v298
    %v313 = vadd.f32 %v296, %v298
    %v314 = vadd.f32 %v297, %v298
    %s315 = sld [smem:[#allocation2 + $0x1]]
    %v316 = vstv %s315
    %v317 = vmul.f32 %v316, %v102
    %v318 = vmul.f32 %v316, %v103
    %v319 = vmul.f32 %v316, %v104
    %v320 = vmul.f32 %v316, %v105
    %v321 = vmul.f32 %v316, %v106
    %v322 = vmul.f32 %v316, %v107
    %v323 = vmul.f32 %v316, %v108
    %v324 = vmul.f32 %v316, %v109
    %v325 = vmul.f32 %v316, %v110
    %v326 = vmul.f32 %v316, %v111
    %v327 = vmul.f32 %v316, %v112
    %v328 = vmul.f32 %v316, %v113
    %v329 = vmul.f32 %v316, %v114
    %v330 = vmul.f32 %v316, %v115
    %v331 = vmul.f32 %v316, %v116
    %v332 = vmul.f32 %v316, %v117
    %s333 = sld [smem:[#allocation2 + $0x4]]
    %v334 = vstv %s333
    %v335 = vmul.f32 %v334, %v175
    %v336 = vmul.f32 %v334, %v176
    %v337 = vmul.f32 %v334, %v173
    %v338 = vmul.f32 %v334, %v174
    %v339 = vmul.f32 %v334, %v171
    %v340 = vmul.f32 %v334, %v172
    %v341 = vmul.f32 %v334, %v169
    %v342 = vmul.f32 %v334, %v170
    %v343 = vmul.f32 %v334, %v167
    %v344 = vmul.f32 %v334, %v168
    %v345 = vmul.f32 %v334, %v165
    %v346 = vmul.f32 %v334, %v166
    %v347 = vmul.f32 %v334, %v163
    %v348 = vmul.f32 %v334, %v164
    %v349 = vmul.f32 %v334, %v177
    %v350 = vmul.f32 %v334, %v178
    %v351 = vadd.f32 %v317, %v335
    %v352 = vadd.f32 %v318, %v336
    %v353 = vadd.f32 %v319, %v337
    %v354 = vadd.f32 %v320, %v338
    %v355 = vadd.f32 %v321, %v339
    %v356 = vadd.f32 %v322, %v340
    %v357 = vadd.f32 %v323, %v341
    %v358 = vadd.f32 %v324, %v342
    %v359 = vadd.f32 %v325, %v343
    %v360 = vadd.f32 %v326, %v344
    %v361 = vadd.f32 %v327, %v345
    %v362 = vadd.f32 %v328, %v346
    %v363 = vadd.f32 %v329, %v347
    %v364 = vadd.f32 %v330, %v348
    %v365 = vadd.f32 %v331, %v349
    %v366 = vadd.f32 %v332, %v350
    %s367 = sld [smem:[#allocation2 + $0x7]]
    %v368 = vstv %s367
    %v369 = vmul.f32 %v368, %v208
    %v370 = vmul.f32 %v368, %v209
    %v371 = vmul.f32 %v368, %v206
    %v372 = vmul.f32 %v368, %v207
    %v373 = vmul.f32 %v368, %v204
    %v374 = vmul.f32 %v368, %v205
    %v375 = vmul.f32 %v368, %v202
    %v376 = vmul.f32 %v368, %v203
    %v377 = vmul.f32 %v368, %v200
    %v378 = vmul.f32 %v368, %v201
    %v379 = vmul.f32 %v368, %v198
    %v380 = vmul.f32 %v368, %v199
    %v381 = vmul.f32 %v368, %v196
    %v382 = vmul.f32 %v368, %v197
    %v383 = vmul.f32 %v368, %v210
    %v384 = vmul.f32 %v368, %v211
    %v385 = vadd.f32 %v351, %v369
    %v386 = vadd.f32 %v352, %v370
    %v387 = vadd.f32 %v353, %v371
    %v388 = vadd.f32 %v354, %v372
    %v389 = vadd.f32 %v355, %v373
    %v390 = vadd.f32 %v356, %v374
    %v391 = vadd.f32 %v357, %v375
    %v392 = vadd.f32 %v358, %v376
    %v393 = vadd.f32 %v359, %v377
    %v394 = vadd.f32 %v360, %v378
    %v395 = vadd.f32 %v361, %v379
    %v396 = vadd.f32 %v362, %v380
    %v397 = vadd.f32 %v363, %v381
    %v398 = vadd.f32 %v364, %v382
    %v399 = vadd.f32 %v365, %v383
    %v400 = vadd.f32 %v366, %v384
    %401 = vrot.lane.b32.xlu0 %v385, 127
    %v402 = vpop.permute.xlu0 %401
    %403 = vrot.lane.b32.xlu0 %v387, 127
    %v404 = vpop.permute.xlu0 %403
    %405 = vrot.lane.b32.xlu0 %v389, 127
    %v406 = vpop.permute.xlu0 %405
    %407 = vrot.lane.b32.xlu0 %v391, 127
    %v408 = vpop.permute.xlu0 %407
    %409 = vrot.lane.b32.xlu0 %v393, 127
    %v410 = vpop.permute.xlu0 %409
    %411 = vrot.lane.b32.xlu0 %v395, 127
    %v412 = vpop.permute.xlu0 %411
    %413 = vrot.lane.b32.xlu0 %v397, 127
    %v414 = vpop.permute.xlu0 %413
    %415 = vrot.lane.b32.xlu0 %v399, 127
    %v416 = vpop.permute.xlu0 %415
    %417 = vrot.lane.b32.xlu0 %v386, 127
    %v418 = vpop.permute.xlu0 %417
    %419 = vrot.lane.b32.xlu0 %v388, 127
    %v420 = vpop.permute.xlu0 %419
    %421 = vrot.lane.b32.xlu0 %v390, 127
    %v422 = vpop.permute.xlu0 %421
    %423 = vrot.lane.b32.xlu0 %v392, 127
    %v424 = vpop.permute.xlu0 %423
    %425 = vrot.lane.b32.xlu0 %v394, 127
    %v426 = vpop.permute.xlu0 %425
    %427 = vrot.lane.b32.xlu0 %v396, 127
    %v428 = vpop.permute.xlu0 %427
    %429 = vrot.lane.b32.xlu0 %v398, 127
    %v430 = vpop.permute.xlu0 %429
    %431 = vrot.lane.b32.xlu0 %v400, 127
    %v432 = vpop.permute.xlu0 %431
    %v433 = vlaneseq
    %v434 = vand.u32 %v433, 127
    %vm435 = vcmp.lt.s32.totalorder %v434, 127
    %v436 = vsel %vm435, %v402, %v418
    %v437 = vsel %vm435, %v404, %v420
    %v438 = vsel %vm435, %v406, %v422
    %v439 = vsel %vm435, %v408, %v424
    %v440 = vsel %vm435, %v410, %v426
    %v441 = vsel %vm435, %v412, %v428
    %v442 = vsel %vm435, %v414, %v430
    %v443 = vsel %vm435, %v416, %v432
    %v444 = vsel %vm435, %v418, %v402
    %v445 = vsel %vm435, %v420, %v404
    %v446 = vsel %vm435, %v422, %v406
    %v447 = vsel %vm435, %v424, %v408
    %v448 = vsel %vm435, %v426, %v410
    %v449 = vsel %vm435, %v428, %v412
    %v450 = vsel %vm435, %v430, %v414
    %v451 = vsel %vm435, %v432, %v416
    %v452 = vadd.f32 %v299, %v436
    %v453 = vadd.f32 %v300, %v444
    %v454 = vadd.f32 %v301, %v437
    %v455 = vadd.f32 %v302, %v445
    %v456 = vadd.f32 %v303, %v438
    %v457 = vadd.f32 %v304, %v446
    %v458 = vadd.f32 %v305, %v439
    %v459 = vadd.f32 %v306, %v447
    %v460 = vadd.f32 %v307, %v440
    %v461 = vadd.f32 %v308, %v448
    %v462 = vadd.f32 %v309, %v441
    %v463 = vadd.f32 %v310, %v449
    %v464 = vadd.f32 %v311, %v442
    %v465 = vadd.f32 %v312, %v450
    %v466 = vadd.f32 %v313, %v443
    %v467 = vadd.f32 %v314, %v451
    %s468 = sld [smem:[#allocation2 + $0x2]]
    %v469 = vstv %s468
    %v470 = vmul.f32 %v469, %v102
    %v471 = vmul.f32 %v469, %v103
    %v472 = vmul.f32 %v469, %v104
    %v473 = vmul.f32 %v469, %v105
    %v474 = vmul.f32 %v469, %v106
    %v475 = vmul.f32 %v469, %v107
    %v476 = vmul.f32 %v469, %v108
    %v477 = vmul.f32 %v469, %v109
    %v478 = vmul.f32 %v469, %v110
    %v479 = vmul.f32 %v469, %v111
    %v480 = vmul.f32 %v469, %v112
    %v481 = vmul.f32 %v469, %v113
    %v482 = vmul.f32 %v469, %v114
    %v483 = vmul.f32 %v469, %v115
    %v484 = vmul.f32 %v469, %v116
    %v485 = vmul.f32 %v469, %v117
    %s486 = sld [smem:[#allocation2 + $0x5]]
    %v487 = vstv %s486
    %v488 = vmul.f32 %v487, %v175
    %v489 = vmul.f32 %v487, %v176
    %v490 = vmul.f32 %v487, %v173
    %v491 = vmul.f32 %v487, %v174
    %v492 = vmul.f32 %v487, %v171
    %v493 = vmul.f32 %v487, %v172
    %v494 = vmul.f32 %v487, %v169
    %v495 = vmul.f32 %v487, %v170
    %v496 = vmul.f32 %v487, %v167
    %v497 = vmul.f32 %v487, %v168
    %v498 = vmul.f32 %v487, %v165
    %v499 = vmul.f32 %v487, %v166
    %v500 = vmul.f32 %v487, %v163
    %v501 = vmul.f32 %v487, %v164
    %v502 = vmul.f32 %v487, %v177
    %v503 = vmul.f32 %v487, %v178
    %v504 = vadd.f32 %v470, %v488
    %v505 = vadd.f32 %v471, %v489
    %v506 = vadd.f32 %v472, %v490
    %v507 = vadd.f32 %v473, %v491
    %v508 = vadd.f32 %v474, %v492
    %v509 = vadd.f32 %v475, %v493
    %v510 = vadd.f32 %v476, %v494
    %v511 = vadd.f32 %v477, %v495
    %v512 = vadd.f32 %v478, %v496
    %v513 = vadd.f32 %v479, %v497
    %v514 = vadd.f32 %v480, %v498
    %v515 = vadd.f32 %v481, %v499
    %v516 = vadd.f32 %v482, %v500
    %v517 = vadd.f32 %v483, %v501
    %v518 = vadd.f32 %v484, %v502
    %v519 = vadd.f32 %v485, %v503
    %s520 = sld [smem:[#allocation2 + $0x8]]
    %v521 = vstv %s520
    %v522 = vmul.f32 %v521, %v208
    %v523 = vmul.f32 %v521, %v209
    %v524 = vmul.f32 %v521, %v206
    %v525 = vmul.f32 %v521, %v207
    %v526 = vmul.f32 %v521, %v204
    %v527 = vmul.f32 %v521, %v205
    %v528 = vmul.f32 %v521, %v202
    %v529 = vmul.f32 %v521, %v203
    %v530 = vmul.f32 %v521, %v200
    %v531 = vmul.f32 %v521, %v201
    %v532 = vmul.f32 %v521, %v198
    %v533 = vmul.f32 %v521, %v199
    %v534 = vmul.f32 %v521, %v196
    %v535 = vmul.f32 %v521, %v197
    %v536 = vmul.f32 %v521, %v210
    %v537 = vmul.f32 %v521, %v211
    %v538 = vadd.f32 %v504, %v522
    %v539 = vadd.f32 %v505, %v523
    %v540 = vadd.f32 %v506, %v524
    %v541 = vadd.f32 %v507, %v525
    %v542 = vadd.f32 %v508, %v526
    %v543 = vadd.f32 %v509, %v527
    %v544 = vadd.f32 %v510, %v528
    %v545 = vadd.f32 %v511, %v529
    %v546 = vadd.f32 %v512, %v530
    %v547 = vadd.f32 %v513, %v531
    %v548 = vadd.f32 %v514, %v532
    %v549 = vadd.f32 %v515, %v533
    %v550 = vadd.f32 %v516, %v534
    %v551 = vadd.f32 %v517, %v535
    %v552 = vadd.f32 %v518, %v536
    %v553 = vadd.f32 %v519, %v537
    %554 = vrot.lane.b32.xlu0 %v538, 126
    %v555 = vpop.permute.xlu0 %554
    %556 = vrot.lane.b32.xlu0 %v540, 126
    %v557 = vpop.permute.xlu0 %556
    %558 = vrot.lane.b32.xlu0 %v542, 126
    %v559 = vpop.permute.xlu0 %558
    %560 = vrot.lane.b32.xlu0 %v544, 126
    %v561 = vpop.permute.xlu0 %560
    %562 = vrot.lane.b32.xlu0 %v546, 126
    %v563 = vpop.permute.xlu0 %562
    %564 = vrot.lane.b32.xlu0 %v548, 126
    %v565 = vpop.permute.xlu0 %564
    %566 = vrot.lane.b32.xlu0 %v550, 126
    %v567 = vpop.permute.xlu0 %566
    %568 = vrot.lane.b32.xlu0 %v552, 126
    %v569 = vpop.permute.xlu0 %568
    %570 = vrot.lane.b32.xlu0 %v539, 126
    %v571 = vpop.permute.xlu0 %570
    %572 = vrot.lane.b32.xlu0 %v541, 126
    %v573 = vpop.permute.xlu0 %572
    %574 = vrot.lane.b32.xlu0 %v543, 126
    %v575 = vpop.permute.xlu0 %574
    %576 = vrot.lane.b32.xlu0 %v545, 126
    %v577 = vpop.permute.xlu0 %576
    %578 = vrot.lane.b32.xlu0 %v547, 126
    %v579 = vpop.permute.xlu0 %578
    %580 = vrot.lane.b32.xlu0 %v549, 126
    %v581 = vpop.permute.xlu0 %580
    %582 = vrot.lane.b32.xlu0 %v551, 126
    %v583 = vpop.permute.xlu0 %582
    %584 = vrot.lane.b32.xlu0 %v553, 126
    %v585 = vpop.permute.xlu0 %584
    %vm586 = vcmp.lt.s32.totalorder %v434, 126
    %v587 = vsel %vm586, %v555, %v571
    %v588 = vsel %vm586, %v557, %v573
    %v589 = vsel %vm586, %v559, %v575
    %v590 = vsel %vm586, %v561, %v577
    %v591 = vsel %vm586, %v563, %v579
    %v592 = vsel %vm586, %v565, %v581
    %v593 = vsel %vm586, %v567, %v583
    %v594 = vsel %vm586, %v569, %v585
    %v595 = vsel %vm586, %v571, %v555
    %v596 = vsel %vm586, %v573, %v557
    %v597 = vsel %vm586, %v575, %v559
    %v598 = vsel %vm586, %v577, %v561
    %v599 = vsel %vm586, %v579, %v563
    %v600 = vsel %vm586, %v581, %v565
    %v601 = vsel %vm586, %v583, %v567
    %v602 = vsel %vm586, %v585, %v569
    %v603 = vadd.f32 %v452, %v587
    %v604 = vadd.f32 %v453, %v595
    %v605 = vadd.f32 %v454, %v588
    %v606 = vadd.f32 %v455, %v596
    %v607 = vadd.f32 %v456, %v589
    %v608 = vadd.f32 %v457, %v597
    %v609 = vadd.f32 %v458, %v590
    %v610 = vadd.f32 %v459, %v598
    %v611 = vadd.f32 %v460, %v591
    %v612 = vadd.f32 %v461, %v599
    %v613 = vadd.f32 %v462, %v592
    %v614 = vadd.f32 %v463, %v600
    %v615 = vadd.f32 %v464, %v593
    %v616 = vadd.f32 %v465, %v601
    %v617 = vadd.f32 %v466, %v594
    %v618 = vadd.f32 %v467, %v602
    %619 = vrot.lane.b32.xlu0 %v603, 127
    %v620 = vpop.permute.xlu0 %619
    %621 = vrot.lane.b32.xlu0 %v605, 127
    %v622 = vpop.permute.xlu0 %621
    %623 = vrot.lane.b32.xlu0 %v607, 127
    %v624 = vpop.permute.xlu0 %623
    %625 = vrot.lane.b32.xlu0 %v609, 127
    %v626 = vpop.permute.xlu0 %625
    %627 = vrot.lane.b32.xlu0 %v611, 127
    %v628 = vpop.permute.xlu0 %627
    %629 = vrot.lane.b32.xlu0 %v613, 127
    %v630 = vpop.permute.xlu0 %629
    %631 = vrot.lane.b32.xlu0 %v615, 127
    %v632 = vpop.permute.xlu0 %631
    %633 = vrot.lane.b32.xlu0 %v617, 127
    %v634 = vpop.permute.xlu0 %633
    %635 = vrot.lane.b32.xlu0 %v604, 127
    %v636 = vpop.permute.xlu0 %635
    %637 = vrot.lane.b32.xlu0 %v606, 127
    %v638 = vpop.permute.xlu0 %637
    %639 = vrot.lane.b32.xlu0 %v608, 127
    %v640 = vpop.permute.xlu0 %639
    %641 = vrot.lane.b32.xlu0 %v610, 127
    %v642 = vpop.permute.xlu0 %641
    %643 = vrot.lane.b32.xlu0 %v612, 127
    %v644 = vpop.permute.xlu0 %643
    %645 = vrot.lane.b32.xlu0 %v614, 127
    %v646 = vpop.permute.xlu0 %645
    %647 = vrot.lane.b32.xlu0 %v616, 127
    %v648 = vpop.permute.xlu0 %647
    %649 = vrot.lane.b32.xlu0 %v618, 127
    %v650 = vpop.permute.xlu0 %649
    %v651 = vsel %vm435, %v620, %v636
    %v652 = vsel %vm435, %v622, %v638
    %v653 = vsel %vm435, %v624, %v640
    %v654 = vsel %vm435, %v626, %v642
    %v655 = vsel %vm435, %v628, %v644
    %v656 = vsel %vm435, %v630, %v646
    %v657 = vsel %vm435, %v632, %v648
    %v658 = vsel %vm435, %v634, %v650
    %v659 = vsel %vm435, %v636, %v620
    %v660 = vsel %vm435, %v638, %v622
    %v661 = vsel %vm435, %v640, %v624
    %v662 = vsel %vm435, %v642, %v626
    %v663 = vsel %vm435, %v644, %v628
    %v664 = vsel %vm435, %v646, %v630
    %v665 = vsel %vm435, %v648, %v632
    %v666 = vsel %vm435, %v650, %v634
    %v667 = vmax.f32 %v603, %v651
    %v668 = vmax.f32 %v604, %v659
    %v669 = vmax.f32 %v605, %v652
    %v670 = vmax.f32 %v606, %v660
    %v671 = vmax.f32 %v607, %v653
    %v672 = vmax.f32 %v608, %v661
    %v673 = vmax.f32 %v609, %v654
    %v674 = vmax.f32 %v610, %v662
    %v675 = vmax.f32 %v611, %v655
    %v676 = vmax.f32 %v612, %v663
    %v677 = vmax.f32 %v613, %v656
    %v678 = vmax.f32 %v614, %v664
    %v679 = vmax.f32 %v615, %v657
    %v680 = vmax.f32 %v616, %v665
    %v681 = vmax.f32 %v617, %v658
    %v682 = vmax.f32 %v618, %v666
    %v683 = vrot.slane %v667, 1
    %v684 = vrot.slane %v668, 1
    %v685 = vrot.slane %v669, 1
    %v686 = vrot.slane %v670, 1
    %v687 = vrot.slane %v671, 1
    %v688 = vrot.slane %v672, 1
    %v689 = vrot.slane %v673, 1
    %v690 = vrot.slane %v674, 1
    %v691 = vrot.slane %v675, 1
    %v692 = vrot.slane %v676, 1
    %v693 = vrot.slane %v677, 1
    %v694 = vrot.slane %v678, 1
    %v695 = vrot.slane %v679, 1
    %v696 = vrot.slane %v680, 1
    %v697 = vrot.slane %v681, 1
    %v698 = vrot.slane %v682, 1
    %v699 = vsel %vm162, %v695, %v697
    %v700 = vsel %vm162, %v696, %v698
    %v701 = vsel %vm162, %v693, %v695
    %v702 = vsel %vm162, %v694, %v696
    %v703 = vsel %vm162, %v691, %v693
    %v704 = vsel %vm162, %v692, %v694
    %v705 = vsel %vm162, %v689, %v691
    %v706 = vsel %vm162, %v690, %v692
    %v707 = vsel %vm162, %v687, %v689
    %v708 = vsel %vm162, %v688, %v690
    %v709 = vsel %vm162, %v685, %v687
    %v710 = vsel %vm162, %v686, %v688
    %v711 = vsel %vm162, %v683, %v685
    %v712 = vsel %vm162, %v684, %v686
    %v713 = vsel %vm162, %v697, %v683
    %v714 = vsel %vm162, %v698, %v684
    %v715 = vmax.f32 %v667, %v711
    %v716 = vmax.f32 %v668, %v712
    %v717 = vmax.f32 %v669, %v709
    %v718 = vmax.f32 %v670, %v710
    %v719 = vmax.f32 %v671, %v707
    %v720 = vmax.f32 %v672, %v708
    %v721 = vmax.f32 %v673, %v705
    %v722 = vmax.f32 %v674, %v706
    %v723 = vmax.f32 %v675, %v703
    %v724 = vmax.f32 %v676, %v704
    %v725 = vmax.f32 %v677, %v701
    %v726 = vmax.f32 %v678, %v702
    %v727 = vmax.f32 %v679, %v699
    %v728 = vmax.f32 %v680, %v700
    %v729 = vmax.f32 %v681, %v713
    %v730 = vmax.f32 %v682, %v714
    %v731 = vmax.f32 %v715, 0.0
    %v732 = vmax.f32 %v716, 0.0
    %v733 = vmax.f32 %v717, 0.0
    %v734 = vmax.f32 %v718, 0.0
    %v735 = vmax.f32 %v719, 0.0
    %v736 = vmax.f32 %v720, 0.0
    %v737 = vmax.f32 %v721, 0.0
    %v738 = vmax.f32 %v722, 0.0
    %v739 = vmax.f32 %v723, 0.0
    %v740 = vmax.f32 %v724, 0.0
    %v741 = vmax.f32 %v725, 0.0
    %v742 = vmax.f32 %v726, 0.0
    %v743 = vmax.f32 %v727, 0.0
    %v744 = vmax.f32 %v728, 0.0
    %v745 = vmax.f32 %v729, 0.0
    %v746 = vmax.f32 %v730, 0.0
    %v747 = vrot.slane %v731, 2
    %v748 = vrot.slane %v732, 2
    %v749 = vrot.slane %v733, 2
    %v750 = vrot.slane %v734, 2
    %v751 = vrot.slane %v735, 2
    %v752 = vrot.slane %v736, 2
    %v753 = vrot.slane %v737, 2
    %v754 = vrot.slane %v738, 2
    %v755 = vrot.slane %v739, 2
    %v756 = vrot.slane %v740, 2
    %v757 = vrot.slane %v741, 2
    %v758 = vrot.slane %v742, 2
    %v759 = vrot.slane %v743, 2
    %v760 = vrot.slane %v744, 2
    %v761 = vrot.slane %v745, 2
    %v762 = vrot.slane %v746, 2
    %v763 = vsel %vm195, %v759, %v761
    %v764 = vsel %vm195, %v760, %v762
    %v765 = vsel %vm195, %v757, %v759
    %v766 = vsel %vm195, %v758, %v760
    %v767 = vsel %vm195, %v755, %v757
    %v768 = vsel %vm195, %v756, %v758
    %v769 = vsel %vm195, %v753, %v755
    %v770 = vsel %vm195, %v754, %v756
    %v771 = vsel %vm195, %v751, %v753
    %v772 = vsel %vm195, %v752, %v754
    %v773 = vsel %vm195, %v749, %v751
    %v774 = vsel %vm195, %v750, %v752
    %v775 = vsel %vm195, %v747, %v749
    %v776 = vsel %vm195, %v748, %v750
    %v777 = vsel %vm195, %v761, %v747
    %v778 = vsel %vm195, %v762, %v748
    %v779 = vrot.slane %v731, 4
    %v780 = vrot.slane %v732, 4
    %v781 = vrot.slane %v733, 4
    %v782 = vrot.slane %v734, 4
    %v783 = vrot.slane %v735, 4
    %v784 = vrot.slane %v736, 4
    %v785 = vrot.slane %v737, 4
    %v786 = vrot.slane %v738, 4
    %v787 = vrot.slane %v739, 4
    %v788 = vrot.slane %v740, 4
    %v789 = vrot.slane %v741, 4
    %v790 = vrot.slane %v742, 4
    %v791 = vrot.slane %v743, 4
    %v792 = vrot.slane %v744, 4
    %v793 = vrot.slane %v745, 4
    %v794 = vrot.slane %v746, 4
    %vm795 = vcmp.lt.s32.totalorder %v161, 4
    %v796 = vsel %vm795, %v791, %v793
    %v797 = vsel %vm795, %v792, %v794
    %v798 = vsel %vm795, %v789, %v791
    %v799 = vsel %vm795, %v790, %v792
    %v800 = vsel %vm795, %v787, %v789
    %v801 = vsel %vm795, %v788, %v790
    %v802 = vsel %vm795, %v785, %v787
    %v803 = vsel %vm795, %v786, %v788
    %v804 = vsel %vm795, %v783, %v785
    %v805 = vsel %vm795, %v784, %v786
    %v806 = vsel %vm795, %v781, %v783
    %v807 = vsel %vm795, %v782, %v784
    %v808 = vsel %vm795, %v779, %v781
    %v809 = vsel %vm795, %v780, %v782
    %v810 = vsel %vm795, %v793, %v779
    %v811 = vsel %vm795, %v794, %v780
    %s812 = sld [smem:[#allocation4]]
    %v813 = vstv %s812
    %v814 = vmul.f32 %v813, %v731
    %v815 = vmul.f32 %v813, %v732
    %v816 = vmul.f32 %v813, %v733
    %v817 = vmul.f32 %v813, %v734
    %v818 = vmul.f32 %v813, %v735
    %v819 = vmul.f32 %v813, %v736
    %v820 = vmul.f32 %v813, %v737
    %v821 = vmul.f32 %v813, %v738
    %v822 = vmul.f32 %v813, %v739
    %v823 = vmul.f32 %v813, %v740
    %v824 = vmul.f32 %v813, %v741
    %v825 = vmul.f32 %v813, %v742
    %v826 = vmul.f32 %v813, %v743
    %v827 = vmul.f32 %v813, %v744
    %v828 = vmul.f32 %v813, %v745
    %v829 = vmul.f32 %v813, %v746
    %s830 = sld [smem:[#allocation4 + $0x3]]
    %v831 = vstv %s830
    %v832 = vmul.f32 %v831, %v775
    %v833 = vmul.f32 %v831, %v776
    %v834 = vmul.f32 %v831, %v773
    %v835 = vmul.f32 %v831, %v774
    %v836 = vmul.f32 %v831, %v771
    %v837 = vmul.f32 %v831, %v772
    %v838 = vmul.f32 %v831, %v769
    %v839 = vmul.f32 %v831, %v770
    %v840 = vmul.f32 %v831, %v767
    %v841 = vmul.f32 %v831, %v768
    %v842 = vmul.f32 %v831, %v765
    %v843 = vmul.f32 %v831, %v766
    %v844 = vmul.f32 %v831, %v763
    %v845 = vmul.f32 %v831, %v764
    %v846 = vmul.f32 %v831, %v777
    %v847 = vmul.f32 %v831, %v778
    %v848 = vadd.f32 %v814, %v832
    %v849 = vadd.f32 %v815, %v833
    %v850 = vadd.f32 %v816, %v834
    %v851 = vadd.f32 %v817, %v835
    %v852 = vadd.f32 %v818, %v836
    %v853 = vadd.f32 %v819, %v837
    %v854 = vadd.f32 %v820, %v838
    %v855 = vadd.f32 %v821, %v839
    %v856 = vadd.f32 %v822, %v840
    %v857 = vadd.f32 %v823, %v841
    %v858 = vadd.f32 %v824, %v842
    %v859 = vadd.f32 %v825, %v843
    %v860 = vadd.f32 %v826, %v844
    %v861 = vadd.f32 %v827, %v845
    %v862 = vadd.f32 %v828, %v846
    %v863 = vadd.f32 %v829, %v847
    %s864 = sld [smem:[#allocation4 + $0x6]]
    %v865 = vstv %s864
    %v866 = vmul.f32 %v865, %v808
    %v867 = vmul.f32 %v865, %v809
    %v868 = vmul.f32 %v865, %v806
    %v869 = vmul.f32 %v865, %v807
    %v870 = vmul.f32 %v865, %v804
    %v871 = vmul.f32 %v865, %v805
    %v872 = vmul.f32 %v865, %v802
    %v873 = vmul.f32 %v865, %v803
    %v874 = vmul.f32 %v865, %v800
    %v875 = vmul.f32 %v865, %v801
    %v876 = vmul.f32 %v865, %v798
    %v877 = vmul.f32 %v865, %v799
    %v878 = vmul.f32 %v865, %v796
    %v879 = vmul.f32 %v865, %v797
    %v880 = vmul.f32 %v865, %v810
    %v881 = vmul.f32 %v865, %v811
    %v882 = vadd.f32 %v848, %v866
    %v883 = vadd.f32 %v849, %v867
    %v884 = vadd.f32 %v850, %v868
    %v885 = vadd.f32 %v851, %v869
    %v886 = vadd.f32 %v852, %v870
    %v887 = vadd.f32 %v853, %v871
    %v888 = vadd.f32 %v854, %v872
    %v889 = vadd.f32 %v855, %v873
    %v890 = vadd.f32 %v856, %v874
    %v891 = vadd.f32 %v857, %v875
    %v892 = vadd.f32 %v858, %v876
    %v893 = vadd.f32 %v859, %v877
    %v894 = vadd.f32 %v860, %v878
    %v895 = vadd.f32 %v861, %v879
    %v896 = vadd.f32 %v862, %v880
    %v897 = vadd.f32 %v863, %v881
    %v898 = vstv %s143
    %v899 = vadd.f32 %v882, %v898
    %v900 = vadd.f32 %v883, %v898
    %v901 = vadd.f32 %v884, %v898
    %v902 = vadd.f32 %v885, %v898
    %v903 = vadd.f32 %v886, %v898
    %v904 = vadd.f32 %v887, %v898
    %v905 = vadd.f32 %v888, %v898
    %v906 = vadd.f32 %v889, %v898
    %v907 = vadd.f32 %v890, %v898
    %v908 = vadd.f32 %v891, %v898
    %v909 = vadd.f32 %v892, %v898
    %v910 = vadd.f32 %v893, %v898
    %v911 = vadd.f32 %v894, %v898
    %v912 = vadd.f32 %v895, %v898
    %v913 = vadd.f32 %v896, %v898
    %v914 = vadd.f32 %v897, %v898
    %s915 = sld [smem:[#allocation4 + $0x1]]
    %v916 = vstv %s915
    %v917 = vmul.f32 %v916, %v731
    %v918 = vmul.f32 %v916, %v732
    %v919 = vmul.f32 %v916, %v733
    %v920 = vmul.f32 %v916, %v734
    %v921 = vmul.f32 %v916, %v735
    %v922 = vmul.f32 %v916, %v736
    %v923 = vmul.f32 %v916, %v737
    %v924 = vmul.f32 %v916, %v738
    %v925 = vmul.f32 %v916, %v739
    %v926 = vmul.f32 %v916, %v740
    %v927 = vmul.f32 %v916, %v741
    %v928 = vmul.f32 %v916, %v742
    %v929 = vmul.f32 %v916, %v743
    %v930 = vmul.f32 %v916, %v744
    %v931 = vmul.f32 %v916, %v745
    %v932 = vmul.f32 %v916, %v746
    %s933 = sld [smem:[#allocation4 + $0x4]]
    %v934 = vstv %s933
    %v935 = vmul.f32 %v934, %v775
    %v936 = vmul.f32 %v934, %v776
    %v937 = vmul.f32 %v934, %v773
    %v938 = vmul.f32 %v934, %v774
    %v939 = vmul.f32 %v934, %v771
    %v940 = vmul.f32 %v934, %v772
    %v941 = vmul.f32 %v934, %v769
    %v942 = vmul.f32 %v934, %v770
    %v943 = vmul.f32 %v934, %v767
    %v944 = vmul.f32 %v934, %v768
    %v945 = vmul.f32 %v934, %v765
    %v946 = vmul.f32 %v934, %v766
    %v947 = vmul.f32 %v934, %v763
    %v948 = vmul.f32 %v934, %v764
    %v949 = vmul.f32 %v934, %v777
    %v950 = vmul.f32 %v934, %v778
    %v951 = vadd.f32 %v917, %v935
    %v952 = vadd.f32 %v918, %v936
    %v953 = vadd.f32 %v919, %v937
    %v954 = vadd.f32 %v920, %v938
    %v955 = vadd.f32 %v921, %v939
    %v956 = vadd.f32 %v922, %v940
    %v957 = vadd.f32 %v923, %v941
    %v958 = vadd.f32 %v924, %v942
    %v959 = vadd.f32 %v925, %v943
    %v960 = vadd.f32 %v926, %v944
    %v961 = vadd.f32 %v927, %v945
    %v962 = vadd.f32 %v928, %v946
    %v963 = vadd.f32 %v929, %v947
    %v964 = vadd.f32 %v930, %v948
    %v965 = vadd.f32 %v931, %v949
    %v966 = vadd.f32 %v932, %v950
    %s967 = sld [smem:[#allocation4 + $0x7]]
    %v968 = vstv %s967
    %v969 = vmul.f32 %v968, %v808
    %v970 = vmul.f32 %v968, %v809
    %v971 = vmul.f32 %v968, %v806
    %v972 = vmul.f32 %v968, %v807
    %v973 = vmul.f32 %v968, %v804
    %v974 = vmul.f32 %v968, %v805
    %v975 = vmul.f32 %v968, %v802
    %v976 = vmul.f32 %v968, %v803
    %v977 = vmul.f32 %v968, %v800
    %v978 = vmul.f32 %v968, %v801
    %v979 = vmul.f32 %v968, %v798
    %v980 = vmul.f32 %v968, %v799
    %v981 = vmul.f32 %v968, %v796
    %v982 = vmul.f32 %v968, %v797
    %v983 = vmul.f32 %v968, %v810
    %v984 = vmul.f32 %v968, %v811
    %v985 = vadd.f32 %v951, %v969
    %v986 = vadd.f32 %v952, %v970
    %v987 = vadd.f32 %v953, %v971
    %v988 = vadd.f32 %v954, %v972
    %v989 = vadd.f32 %v955, %v973
    %v990 = vadd.f32 %v956, %v974
    %v991 = vadd.f32 %v957, %v975
    %v992 = vadd.f32 %v958, %v976
    %v993 = vadd.f32 %v959, %v977
    %v994 = vadd.f32 %v960, %v978
    %v995 = vadd.f32 %v961, %v979
    %v996 = vadd.f32 %v962, %v980
    %v997 = vadd.f32 %v963, %v981
    %v998 = vadd.f32 %v964, %v982
    %v999 = vadd.f32 %v965, %v983
    %v1000 = vadd.f32 %v966, %v984
    %1001 = vrot.lane.b32.xlu0 %v985, 126
    %v1002 = vpop.permute.xlu0 %1001
    %1003 = vrot.lane.b32.xlu0 %v987, 126
    %v1004 = vpop.permute.xlu0 %1003
    %1005 = vrot.lane.b32.xlu0 %v989, 126
    %v1006 = vpop.permute.xlu0 %1005
    %1007 = vrot.lane.b32.xlu0 %v991, 126
    %v1008 = vpop.permute.xlu0 %1007
    %1009 = vrot.lane.b32.xlu0 %v993, 126
    %v1010 = vpop.permute.xlu0 %1009
    %1011 = vrot.lane.b32.xlu0 %v995, 126
    %v1012 = vpop.permute.xlu0 %1011
    %1013 = vrot.lane.b32.xlu0 %v997, 126
    %v1014 = vpop.permute.xlu0 %1013
    %1015 = vrot.lane.b32.xlu0 %v999, 126
    %v1016 = vpop.permute.xlu0 %1015
    %1017 = vrot.lane.b32.xlu0 %v986, 126
    %v1018 = vpop.permute.xlu0 %1017
    %1019 = vrot.lane.b32.xlu0 %v988, 126
    %v1020 = vpop.permute.xlu0 %1019
    %1021 = vrot.lane.b32.xlu0 %v990, 126
    %v1022 = vpop.permute.xlu0 %1021
    %1023 = vrot.lane.b32.xlu0 %v992, 126
    %v1024 = vpop.permute.xlu0 %1023
    %1025 = vrot.lane.b32.xlu0 %v994, 126
    %v1026 = vpop.permute.xlu0 %1025
    %1027 = vrot.lane.b32.xlu0 %v996, 126
    %v1028 = vpop.permute.xlu0 %1027
    %1029 = vrot.lane.b32.xlu0 %v998, 126
    %v1030 = vpop.permute.xlu0 %1029
    %1031 = vrot.lane.b32.xlu0 %v1000, 126
    %v1032 = vpop.permute.xlu0 %1031
    %v1033 = vsel %vm586, %v1002, %v1018
    %v1034 = vsel %vm586, %v1004, %v1020
    %v1035 = vsel %vm586, %v1006, %v1022
    %v1036 = vsel %vm586, %v1008, %v1024
    %v1037 = vsel %vm586, %v1010, %v1026
    %v1038 = vsel %vm586, %v1012, %v1028
    %v1039 = vsel %vm586, %v1014, %v1030
    %v1040 = vsel %vm586, %v1016, %v1032
    %v1041 = vsel %vm586, %v1018, %v1002
    %v1042 = vsel %vm586, %v1020, %v1004
    %v1043 = vsel %vm586, %v1022, %v1006
    %v1044 = vsel %vm586, %v1024, %v1008
    %v1045 = vsel %vm586, %v1026, %v1010
    %v1046 = vsel %vm586, %v1028, %v1012
    %v1047 = vsel %vm586, %v1030, %v1014
    %v1048 = vsel %vm586, %v1032, %v1016
    %v1049 = vadd.f32 %v899, %v1033
    %v1050 = vadd.f32 %v900, %v1041
    %v1051 = vadd.f32 %v901, %v1034
    %v1052 = vadd.f32 %v902, %v1042
    %v1053 = vadd.f32 %v903, %v1035
    %v1054 = vadd.f32 %v904, %v1043
    %v1055 = vadd.f32 %v905, %v1036
    %v1056 = vadd.f32 %v906, %v1044
    %v1057 = vadd.f32 %v907, %v1037
    %v1058 = vadd.f32 %v908, %v1045
    %v1059 = vadd.f32 %v909, %v1038
    %v1060 = vadd.f32 %v910, %v1046
    %v1061 = vadd.f32 %v911, %v1039
    %v1062 = vadd.f32 %v912, %v1047
    %v1063 = vadd.f32 %v913, %v1040
    %v1064 = vadd.f32 %v914, %v1048
    %s1065 = sld [smem:[#allocation4 + $0x2]]
    %v1066 = vstv %s1065
    %v1067 = vmul.f32 %v1066, %v731
    %v1068 = vmul.f32 %v1066, %v732
    %v1069 = vmul.f32 %v1066, %v733
    %v1070 = vmul.f32 %v1066, %v734
    %v1071 = vmul.f32 %v1066, %v735
    %v1072 = vmul.f32 %v1066, %v736
    %v1073 = vmul.f32 %v1066, %v737
    %v1074 = vmul.f32 %v1066, %v738
    %v1075 = vmul.f32 %v1066, %v739
    %v1076 = vmul.f32 %v1066, %v740
    %v1077 = vmul.f32 %v1066, %v741
    %v1078 = vmul.f32 %v1066, %v742
    %v1079 = vmul.f32 %v1066, %v743
    %v1080 = vmul.f32 %v1066, %v744
    %v1081 = vmul.f32 %v1066, %v745
    %v1082 = vmul.f32 %v1066, %v746
    %s1083 = sld [smem:[#allocation4 + $0x5]]
    %v1084 = vstv %s1083
    %v1085 = vmul.f32 %v1084, %v775
    %v1086 = vmul.f32 %v1084, %v776
    %v1087 = vmul.f32 %v1084, %v773
    %v1088 = vmul.f32 %v1084, %v774
    %v1089 = vmul.f32 %v1084, %v771
    %v1090 = vmul.f32 %v1084, %v772
    %v1091 = vmul.f32 %v1084, %v769
    %v1092 = vmul.f32 %v1084, %v770
    %v1093 = vmul.f32 %v1084, %v767
    %v1094 = vmul.f32 %v1084, %v768
    %v1095 = vmul.f32 %v1084, %v765
    %v1096 = vmul.f32 %v1084, %v766
    %v1097 = vmul.f32 %v1084, %v763
    %v1098 = vmul.f32 %v1084, %v764
    %v1099 = vmul.f32 %v1084, %v777
    %v1100 = vmul.f32 %v1084, %v778
    %v1101 = vadd.f32 %v1067, %v1085
    %v1102 = vadd.f32 %v1068, %v1086
    %v1103 = vadd.f32 %v1069, %v1087
    %v1104 = vadd.f32 %v1070, %v1088
    %v1105 = vadd.f32 %v1071, %v1089
    %v1106 = vadd.f32 %v1072, %v1090
    %v1107 = vadd.f32 %v1073, %v1091
    %v1108 = vadd.f32 %v1074, %v1092
    %v1109 = vadd.f32 %v1075, %v1093
    %v1110 = vadd.f32 %v1076, %v1094
    %v1111 = vadd.f32 %v1077, %v1095
    %v1112 = vadd.f32 %v1078, %v1096
    %v1113 = vadd.f32 %v1079, %v1097
    %v1114 = vadd.f32 %v1080, %v1098
    %v1115 = vadd.f32 %v1081, %v1099
    %v1116 = vadd.f32 %v1082, %v1100
    %s1117 = sld [smem:[#allocation4 + $0x8]]
    %v1118 = vstv %s1117
    %v1119 = vmul.f32 %v1118, %v808
    %v1120 = vmul.f32 %v1118, %v809
    %v1121 = vmul.f32 %v1118, %v806
    %v1122 = vmul.f32 %v1118, %v807
    %v1123 = vmul.f32 %v1118, %v804
    %v1124 = vmul.f32 %v1118, %v805
    %v1125 = vmul.f32 %v1118, %v802
    %v1126 = vmul.f32 %v1118, %v803
    %v1127 = vmul.f32 %v1118, %v800
    %v1128 = vmul.f32 %v1118, %v801
    %v1129 = vmul.f32 %v1118, %v798
    %v1130 = vmul.f32 %v1118, %v799
    %v1131 = vmul.f32 %v1118, %v796
    %v1132 = vmul.f32 %v1118, %v797
    %v1133 = vmul.f32 %v1118, %v810
    %v1134 = vmul.f32 %v1118, %v811
    %v1135 = vadd.f32 %v1101, %v1119
    %v1136 = vadd.f32 %v1102, %v1120
    %v1137 = vadd.f32 %v1103, %v1121
    %v1138 = vadd.f32 %v1104, %v1122
    %v1139 = vadd.f32 %v1105, %v1123
    %v1140 = vadd.f32 %v1106, %v1124
    %v1141 = vadd.f32 %v1107, %v1125
    %v1142 = vadd.f32 %v1108, %v1126
    %v1143 = vadd.f32 %v1109, %v1127
    %v1144 = vadd.f32 %v1110, %v1128
    %v1145 = vadd.f32 %v1111, %v1129
    %v1146 = vadd.f32 %v1112, %v1130
    %v1147 = vadd.f32 %v1113, %v1131
    %v1148 = vadd.f32 %v1114, %v1132
    %v1149 = vadd.f32 %v1115, %v1133
    %v1150 = vadd.f32 %v1116, %v1134
    %1151 = vrot.lane.b32.xlu0 %v1135, 124
    %v1152 = vpop.permute.xlu0 %1151
    %1153 = vrot.lane.b32.xlu0 %v1137, 124
    %v1154 = vpop.permute.xlu0 %1153
    %1155 = vrot.lane.b32.xlu0 %v1139, 124
    %v1156 = vpop.permute.xlu0 %1155
    %1157 = vrot.lane.b32.xlu0 %v1141, 124
    %v1158 = vpop.permute.xlu0 %1157
    %1159 = vrot.lane.b32.xlu0 %v1143, 124
    %v1160 = vpop.permute.xlu0 %1159
    %1161 = vrot.lane.b32.xlu0 %v1145, 124
    %v1162 = vpop.permute.xlu0 %1161
    %1163 = vrot.lane.b32.xlu0 %v1147, 124
    %v1164 = vpop.permute.xlu0 %1163
    %1165 = vrot.lane.b32.xlu0 %v1149, 124
    %v1166 = vpop.permute.xlu0 %1165
    %1167 = vrot.lane.b32.xlu0 %v1136, 124
    %v1168 = vpop.permute.xlu0 %1167
    %1169 = vrot.lane.b32.xlu0 %v1138, 124
    %v1170 = vpop.permute.xlu0 %1169
    %1171 = vrot.lane.b32.xlu0 %v1140, 124
    %v1172 = vpop.permute.xlu0 %1171
    %1173 = vrot.lane.b32.xlu0 %v1142, 124
    %v1174 = vpop.permute.xlu0 %1173
    %1175 = vrot.lane.b32.xlu0 %v1144, 124
    %v1176 = vpop.permute.xlu0 %1175
    %1177 = vrot.lane.b32.xlu0 %v1146, 124
    %v1178 = vpop.permute.xlu0 %1177
    %1179 = vrot.lane.b32.xlu0 %v1148, 124
    %v1180 = vpop.permute.xlu0 %1179
    %1181 = vrot.lane.b32.xlu0 %v1150, 124
    %v1182 = vpop.permute.xlu0 %1181
    %vm1183 = vcmp.lt.s32.totalorder %v434, 124
    %v1184 = vsel %vm1183, %v1152, %v1168
    %v1185 = vsel %vm1183, %v1154, %v1170
    %v1186 = vsel %vm1183, %v1156, %v1172
    %v1187 = vsel %vm1183, %v1158, %v1174
    %v1188 = vsel %vm1183, %v1160, %v1176
    %v1189 = vsel %vm1183, %v1162, %v1178
    %v1190 = vsel %vm1183, %v1164, %v1180
    %v1191 = vsel %vm1183, %v1166, %v1182
    %v1192 = vsel %vm1183, %v1168, %v1152
    %v1193 = vsel %vm1183, %v1170, %v1154
    %v1194 = vsel %vm1183, %v1172, %v1156
    %v1195 = vsel %vm1183, %v1174, %v1158
    %v1196 = vsel %vm1183, %v1176, %v1160
    %v1197 = vsel %vm1183, %v1178, %v1162
    %v1198 = vsel %vm1183, %v1180, %v1164
    %v1199 = vsel %vm1183, %v1182, %v1166
    %v1200 = vadd.f32 %v1049, %v1184
    %v1201 = vadd.f32 %v1050, %v1192
    %v1202 = vadd.f32 %v1051, %v1185
    %v1203 = vadd.f32 %v1052, %v1193
    %v1204 = vadd.f32 %v1053, %v1186
    %v1205 = vadd.f32 %v1054, %v1194
    %v1206 = vadd.f32 %v1055, %v1187
    %v1207 = vadd.f32 %v1056, %v1195
    %v1208 = vadd.f32 %v1057, %v1188
    %v1209 = vadd.f32 %v1058, %v1196
    %v1210 = vadd.f32 %v1059, %v1189
    %v1211 = vadd.f32 %v1060, %v1197
    %v1212 = vadd.f32 %v1061, %v1190
    %v1213 = vadd.f32 %v1062, %v1198
    %v1214 = vadd.f32 %v1063, %v1191
    %v1215 = vadd.f32 %v1064, %v1199
    %1216 = vrot.lane.b32.xlu0 %v1200, 126
    %v1217 = vpop.permute.xlu0 %1216
    %1218 = vrot.lane.b32.xlu0 %v1202, 126
    %v1219 = vpop.permute.xlu0 %1218
    %1220 = vrot.lane.b32.xlu0 %v1204, 126
    %v1221 = vpop.permute.xlu0 %1220
    %1222 = vrot.lane.b32.xlu0 %v1206, 126
    %v1223 = vpop.permute.xlu0 %1222
    %1224 = vrot.lane.b32.xlu0 %v1208, 126
    %v1225 = vpop.permute.xlu0 %1224
    %1226 = vrot.lane.b32.xlu0 %v1210, 126
    %v1227 = vpop.permute.xlu0 %1226
    %1228 = vrot.lane.b32.xlu0 %v1212, 126
    %v1229 = vpop.permute.xlu0 %1228
    %1230 = vrot.lane.b32.xlu0 %v1214, 126
    %v1231 = vpop.permute.xlu0 %1230
    %1232 = vrot.lane.b32.xlu0 %v1201, 126
    %v1233 = vpop.permute.xlu0 %1232
    %1234 = vrot.lane.b32.xlu0 %v1203, 126
    %v1235 = vpop.permute.xlu0 %1234
    %1236 = vrot.lane.b32.xlu0 %v1205, 126
    %v1237 = vpop.permute.xlu0 %1236
    %1238 = vrot.lane.b32.xlu0 %v1207, 126
    %v1239 = vpop.permute.xlu0 %1238
    %1240 = vrot.lane.b32.xlu0 %v1209, 126
    %v1241 = vpop.permute.xlu0 %1240
    %1242 = vrot.lane.b32.xlu0 %v1211, 126
    %v1243 = vpop.permute.xlu0 %1242
    %1244 = vrot.lane.b32.xlu0 %v1213, 126
    %v1245 = vpop.permute.xlu0 %1244
    %1246 = vrot.lane.b32.xlu0 %v1215, 126
    %v1247 = vpop.permute.xlu0 %1246
    %v1248 = vsel %vm586, %v1217, %v1233
    %v1249 = vsel %vm586, %v1219, %v1235
    %v1250 = vsel %vm586, %v1221, %v1237
    %v1251 = vsel %vm586, %v1223, %v1239
    %v1252 = vsel %vm586, %v1225, %v1241
    %v1253 = vsel %vm586, %v1227, %v1243
    %v1254 = vsel %vm586, %v1229, %v1245
    %v1255 = vsel %vm586, %v1231, %v1247
    %v1256 = vsel %vm586, %v1233, %v1217
    %v1257 = vsel %vm586, %v1235, %v1219
    %v1258 = vsel %vm586, %v1237, %v1221
    %v1259 = vsel %vm586, %v1239, %v1223
    %v1260 = vsel %vm586, %v1241, %v1225
    %v1261 = vsel %vm586, %v1243, %v1227
    %v1262 = vsel %vm586, %v1245, %v1229
    %v1263 = vsel %vm586, %v1247, %v1231
    %v1264 = vmax.f32 %v1200, %v1248
    %v1265 = vmax.f32 %v1201, %v1256
    %v1266 = vmax.f32 %v1202, %v1249
    %v1267 = vmax.f32 %v1203, %v1257
    %v1268 = vmax.f32 %v1204, %v1250
    %v1269 = vmax.f32 %v1205, %v1258
    %v1270 = vmax.f32 %v1206, %v1251
    %v1271 = vmax.f32 %v1207, %v1259
    %v1272 = vmax.f32 %v1208, %v1252
    %v1273 = vmax.f32 %v1209, %v1260
    %v1274 = vmax.f32 %v1210, %v1253
    %v1275 = vmax.f32 %v1211, %v1261
    %v1276 = vmax.f32 %v1212, %v1254
    %v1277 = vmax.f32 %v1213, %v1262
    %v1278 = vmax.f32 %v1214, %v1255
    %v1279 = vmax.f32 %v1215, %v1263
    %v1280 = vrot.slane %v1264, 2
    %v1281 = vrot.slane %v1265, 2
    %v1282 = vrot.slane %v1266, 2
    %v1283 = vrot.slane %v1267, 2
    %v1284 = vrot.slane %v1268, 2
    %v1285 = vrot.slane %v1269, 2
    %v1286 = vrot.slane %v1270, 2
    %v1287 = vrot.slane %v1271, 2
    %v1288 = vrot.slane %v1272, 2
    %v1289 = vrot.slane %v1273, 2
    %v1290 = vrot.slane %v1274, 2
    %v1291 = vrot.slane %v1275, 2
    %v1292 = vrot.slane %v1276, 2
    %v1293 = vrot.slane %v1277, 2
    %v1294 = vrot.slane %v1278, 2
    %v1295 = vrot.slane %v1279, 2
    %v1296 = vsel %vm195, %v1292, %v1294
    %v1297 = vsel %vm195, %v1293, %v1295
    %v1298 = vsel %vm195, %v1290, %v1292
    %v1299 = vsel %vm195, %v1291, %v1293
    %v1300 = vsel %vm195, %v1288, %v1290
    %v1301 = vsel %vm195, %v1289, %v1291
    %v1302 = vsel %vm195, %v1286, %v1288
    %v1303 = vsel %vm195, %v1287, %v1289
    %v1304 = vsel %vm195, %v1284, %v1286
    %v1305 = vsel %vm195, %v1285, %v1287
    %v1306 = vsel %vm195, %v1282, %v1284
    %v1307 = vsel %vm195, %v1283, %v1285
    %v1308 = vsel %vm195, %v1280, %v1282
    %v1309 = vsel %vm195, %v1281, %v1283
    %v1310 = vsel %vm195, %v1294, %v1280
    %v1311 = vsel %vm195, %v1295, %v1281
    %v1312 = vmax.f32 %v1264, %v1308
    %v1313 = vmax.f32 %v1265, %v1309
    %v1314 = vmax.f32 %v1266, %v1306
    %v1315 = vmax.f32 %v1267, %v1307
    %v1316 = vmax.f32 %v1268, %v1304
    %v1317 = vmax.f32 %v1269, %v1305
    %v1318 = vmax.f32 %v1270, %v1302
    %v1319 = vmax.f32 %v1271, %v1303
    %v1320 = vmax.f32 %v1272, %v1300
    %v1321 = vmax.f32 %v1273, %v1301
    %v1322 = vmax.f32 %v1274, %v1298
    %v1323 = vmax.f32 %v1275, %v1299
    %v1324 = vmax.f32 %v1276, %v1296
    %v1325 = vmax.f32 %v1277, %v1297
    %v1326 = vmax.f32 %v1278, %v1310
    %v1327 = vmax.f32 %v1279, %v1311
    %v1328 = vmax.f32 %v1312, 0.0
    %v1329 = vmax.f32 %v1313, 0.0
    %v1330 = vmax.f32 %v1314, 0.0
    %v1331 = vmax.f32 %v1315, 0.0
    %v1332 = vmax.f32 %v1316, 0.0
    %v1333 = vmax.f32 %v1317, 0.0
    %v1334 = vmax.f32 %v1318, 0.0
    %v1335 = vmax.f32 %v1319, 0.0
    %v1336 = vmax.f32 %v1320, 0.0
    %v1337 = vmax.f32 %v1321, 0.0
    %v1338 = vmax.f32 %v1322, 0.0
    %v1339 = vmax.f32 %v1323, 0.0
    %v1340 = vmax.f32 %v1324, 0.0
    %v1341 = vmax.f32 %v1325, 0.0
    %v1342 = vmax.f32 %v1326, 0.0
    %v1343 = vmax.f32 %v1327, 0.0
    %s1344 = sld [smem:[#allocation9 + $0x2]]
    %s1345 = sld [smem:[#allocation9 + $0x3]]
    %v1346 = vrot.slane %v126, 1
    %v1347 = vrot.slane %v127, 1
    %v1348 = vrot.slane %v128, 1
    %v1349 = vrot.slane %v129, 1
    %v1350 = vrot.slane %v130, 1
    %v1351 = vrot.slane %v131, 1
    %v1352 = vrot.slane %v132, 1
    %v1353 = vrot.slane %v133, 1
    %v1354 = vrot.slane %v134, 1
    %v1355 = vrot.slane %v135, 1
    %v1356 = vrot.slane %v136, 1
    %v1357 = vrot.slane %v137, 1
    %v1358 = vrot.slane %v138, 1
    %v1359 = vrot.slane %v139, 1
    %v1360 = vrot.slane %v140, 1
    %v1361 = vrot.slane %v141, 1
    %v1362 = vsel %vm162, %v1358, %v1360
    %v1363 = vsel %vm162, %v1359, %v1361
    %v1364 = vsel %vm162, %v1356, %v1358
    %v1365 = vsel %vm162, %v1357, %v1359
    %v1366 = vsel %vm162, %v1354, %v1356
    %v1367 = vsel %vm162, %v1355, %v1357
    %v1368 = vsel %vm162, %v1352, %v1354
    %v1369 = vsel %vm162, %v1353, %v1355
    %v1370 = vsel %vm162, %v1350, %v1352
    %v1371 = vsel %vm162, %v1351, %v1353
    %v1372 = vsel %vm162, %v1348, %v1350
    %v1373 = vsel %vm162, %v1349, %v1351
    %v1374 = vsel %vm162, %v1346, %v1348
    %v1375 = vsel %vm162, %v1347, %v1349
    %v1376 = vsel %vm162, %v1360, %v1346
    %v1377 = vsel %vm162, %v1361, %v1347
    %v1378 = vrot.slane %v126, 2
    %v1379 = vrot.slane %v127, 2
    %v1380 = vrot.slane %v128, 2
    %v1381 = vrot.slane %v129, 2
    %v1382 = vrot.slane %v130, 2
    %v1383 = vrot.slane %v131, 2
    %v1384 = vrot.slane %v132, 2
    %v1385 = vrot.slane %v133, 2
    %v1386 = vrot.slane %v134, 2
    %v1387 = vrot.slane %v135, 2
    %v1388 = vrot.slane %v136, 2
    %v1389 = vrot.slane %v137, 2
    %v1390 = vrot.slane %v138, 2
    %v1391 = vrot.slane %v139, 2
    %v1392 = vrot.slane %v140, 2
    %v1393 = vrot.slane %v141, 2
    %v1394 = vsel %vm195, %v1390, %v1392
    %v1395 = vsel %vm195, %v1391, %v1393
    %v1396 = vsel %vm195, %v1388, %v1390
    %v1397 = vsel %vm195, %v1389, %v1391
    %v1398 = vsel %vm195, %v1386, %v1388
    %v1399 = vsel %vm195, %v1387, %v1389
    %v1400 = vsel %vm195, %v1384, %v1386
    %v1401 = vsel %vm195, %v1385, %v1387
    %v1402 = vsel %vm195, %v1382, %v1384
    %v1403 = vsel %vm195, %v1383, %v1385
    %v1404 = vsel %vm195, %v1380, %v1382
    %v1405 = vsel %vm195, %v1381, %v1383
    %v1406 = vsel %vm195, %v1378, %v1380
    %v1407 = vsel %vm195, %v1379, %v1381
    %v1408 = vsel %vm195, %v1392, %v1378
    %v1409 = vsel %vm195, %v1393, %v1379
    %s1410 = sld [smem:[#allocation6]]
    %v1411 = vstv %s1410
    %v1412 = vmul.f32 %v1411, %v126
    %v1413 = vmul.f32 %v1411, %v127
    %v1414 = vmul.f32 %v1411, %v128
    %v1415 = vmul.f32 %v1411, %v129
    %v1416 = vmul.f32 %v1411, %v130
    %v1417 = vmul.f32 %v1411, %v131
    %v1418 = vmul.f32 %v1411, %v132
    %v1419 = vmul.f32 %v1411, %v133
    %v1420 = vmul.f32 %v1411, %v134
    %v1421 = vmul.f32 %v1411, %v135
    %v1422 = vmul.f32 %v1411, %v136
    %v1423 = vmul.f32 %v1411, %v137
    %v1424 = vmul.f32 %v1411, %v138
    %v1425 = vmul.f32 %v1411, %v139
    %v1426 = vmul.f32 %v1411, %v140
    %v1427 = vmul.f32 %v1411, %v141
    %s1428 = sld [smem:[#allocation6 + $0x3]]
    %v1429 = vstv %s1428
    %v1430 = vmul.f32 %v1429, %v1374
    %v1431 = vmul.f32 %v1429, %v1375
    %v1432 = vmul.f32 %v1429, %v1372
    %v1433 = vmul.f32 %v1429, %v1373
    %v1434 = vmul.f32 %v1429, %v1370
    %v1435 = vmul.f32 %v1429, %v1371
    %v1436 = vmul.f32 %v1429, %v1368
    %v1437 = vmul.f32 %v1429, %v1369
    %v1438 = vmul.f32 %v1429, %v1366
    %v1439 = vmul.f32 %v1429, %v1367
    %v1440 = vmul.f32 %v1429, %v1364
    %v1441 = vmul.f32 %v1429, %v1365
    %v1442 = vmul.f32 %v1429, %v1362
    %v1443 = vmul.f32 %v1429, %v1363
    %v1444 = vmul.f32 %v1429, %v1376
    %v1445 = vmul.f32 %v1429, %v1377
    %v1446 = vadd.f32 %v1412, %v1430
    %v1447 = vadd.f32 %v1413, %v1431
    %v1448 = vadd.f32 %v1414, %v1432
    %v1449 = vadd.f32 %v1415, %v1433
    %v1450 = vadd.f32 %v1416, %v1434
    %v1451 = vadd.f32 %v1417, %v1435
    %v1452 = vadd.f32 %v1418, %v1436
    %v1453 = vadd.f32 %v1419, %v1437
    %v1454 = vadd.f32 %v1420, %v1438
    %v1455 = vadd.f32 %v1421, %v1439
    %v1456 = vadd.f32 %v1422, %v1440
    %v1457 = vadd.f32 %v1423, %v1441
    %v1458 = vadd.f32 %v1424, %v1442
    %v1459 = vadd.f32 %v1425, %v1443
    %v1460 = vadd.f32 %v1426, %v1444
    %v1461 = vadd.f32 %v1427, %v1445
    %s1462 = sld [smem:[#allocation6 + $0x6]]
    %v1463 = vstv %s1462
    %v1464 = vmul.f32 %v1463, %v1406
    %v1465 = vmul.f32 %v1463, %v1407
    %v1466 = vmul.f32 %v1463, %v1404
    %v1467 = vmul.f32 %v1463, %v1405
    %v1468 = vmul.f32 %v1463, %v1402
    %v1469 = vmul.f32 %v1463, %v1403
    %v1470 = vmul.f32 %v1463, %v1400
    %v1471 = vmul.f32 %v1463, %v1401
    %v1472 = vmul.f32 %v1463, %v1398
    %v1473 = vmul.f32 %v1463, %v1399
    %v1474 = vmul.f32 %v1463, %v1396
    %v1475 = vmul.f32 %v1463, %v1397
    %v1476 = vmul.f32 %v1463, %v1394
    %v1477 = vmul.f32 %v1463, %v1395
    %v1478 = vmul.f32 %v1463, %v1408
    %v1479 = vmul.f32 %v1463, %v1409
    %v1480 = vadd.f32 %v1446, %v1464
    %v1481 = vadd.f32 %v1447, %v1465
    %v1482 = vadd.f32 %v1448, %v1466
    %v1483 = vadd.f32 %v1449, %v1467
    %v1484 = vadd.f32 %v1450, %v1468
    %v1485 = vadd.f32 %v1451, %v1469
    %v1486 = vadd.f32 %v1452, %v1470
    %v1487 = vadd.f32 %v1453, %v1471
    %v1488 = vadd.f32 %v1454, %v1472
    %v1489 = vadd.f32 %v1455, %v1473
    %v1490 = vadd.f32 %v1456, %v1474
    %v1491 = vadd.f32 %v1457, %v1475
    %v1492 = vadd.f32 %v1458, %v1476
    %v1493 = vadd.f32 %v1459, %v1477
    %v1494 = vadd.f32 %v1460, %v1478
    %v1495 = vadd.f32 %v1461, %v1479
    %v1496 = vstv %s1344
    %v1497 = vadd.f32 %v1480, %v1496
    %v1498 = vadd.f32 %v1481, %v1496
    %v1499 = vadd.f32 %v1482, %v1496
    %v1500 = vadd.f32 %v1483, %v1496
    %v1501 = vadd.f32 %v1484, %v1496
    %v1502 = vadd.f32 %v1485, %v1496
    %v1503 = vadd.f32 %v1486, %v1496
    %v1504 = vadd.f32 %v1487, %v1496
    %v1505 = vadd.f32 %v1488, %v1496
    %v1506 = vadd.f32 %v1489, %v1496
    %v1507 = vadd.f32 %v1490, %v1496
    %v1508 = vadd.f32 %v1491, %v1496
    %v1509 = vadd.f32 %v1492, %v1496
    %v1510 = vadd.f32 %v1493, %v1496
    %v1511 = vadd.f32 %v1494, %v1496
    %v1512 = vadd.f32 %v1495, %v1496
    %s1513 = sld [smem:[#allocation6 + $0x1]]
    %v1514 = vstv %s1513
    %v1515 = vmul.f32 %v1514, %v126
    %v1516 = vmul.f32 %v1514, %v127
    %v1517 = vmul.f32 %v1514, %v128
    %v1518 = vmul.f32 %v1514, %v129
    %v1519 = vmul.f32 %v1514, %v130
    %v1520 = vmul.f32 %v1514, %v131
    %v1521 = vmul.f32 %v1514, %v132
    %v1522 = vmul.f32 %v1514, %v133
    %v1523 = vmul.f32 %v1514, %v134
    %v1524 = vmul.f32 %v1514, %v135
    %v1525 = vmul.f32 %v1514, %v136
    %v1526 = vmul.f32 %v1514, %v137
    %v1527 = vmul.f32 %v1514, %v138
    %v1528 = vmul.f32 %v1514, %v139
    %v1529 = vmul.f32 %v1514, %v140
    %v1530 = vmul.f32 %v1514, %v141
    %s1531 = sld [smem:[#allocation6 + $0x4]]
    %v1532 = vstv %s1531
    %v1533 = vmul.f32 %v1532, %v1374
    %v1534 = vmul.f32 %v1532, %v1375
    %v1535 = vmul.f32 %v1532, %v1372
    %v1536 = vmul.f32 %v1532, %v1373
    %v1537 = vmul.f32 %v1532, %v1370
    %v1538 = vmul.f32 %v1532, %v1371
    %v1539 = vmul.f32 %v1532, %v1368
    %v1540 = vmul.f32 %v1532, %v1369
    %v1541 = vmul.f32 %v1532, %v1366
    %v1542 = vmul.f32 %v1532, %v1367
    %v1543 = vmul.f32 %v1532, %v1364
    %v1544 = vmul.f32 %v1532, %v1365
    %v1545 = vmul.f32 %v1532, %v1362
    %v1546 = vmul.f32 %v1532, %v1363
    %v1547 = vmul.f32 %v1532, %v1376
    %v1548 = vmul.f32 %v1532, %v1377
    %v1549 = vadd.f32 %v1515, %v1533
    %v1550 = vadd.f32 %v1516, %v1534
    %v1551 = vadd.f32 %v1517, %v1535
    %v1552 = vadd.f32 %v1518, %v1536
    %v1553 = vadd.f32 %v1519, %v1537
    %v1554 = vadd.f32 %v1520, %v1538
    %v1555 = vadd.f32 %v1521, %v1539
    %v1556 = vadd.f32 %v1522, %v1540
    %v1557 = vadd.f32 %v1523, %v1541
    %v1558 = vadd.f32 %v1524, %v1542
    %v1559 = vadd.f32 %v1525, %v1543
    %v1560 = vadd.f32 %v1526, %v1544
    %v1561 = vadd.f32 %v1527, %v1545
    %v1562 = vadd.f32 %v1528, %v1546
    %v1563 = vadd.f32 %v1529, %v1547
    %v1564 = vadd.f32 %v1530, %v1548
    %s1565 = sld [smem:[#allocation6 + $0x7]]
    %v1566 = vstv %s1565
    %v1567 = vmul.f32 %v1566, %v1406
    %v1568 = vmul.f32 %v1566, %v1407
    %v1569 = vmul.f32 %v1566, %v1404
    %v1570 = vmul.f32 %v1566, %v1405
    %v1571 = vmul.f32 %v1566, %v1402
    %v1572 = vmul.f32 %v1566, %v1403
    %v1573 = vmul.f32 %v1566, %v1400
    %v1574 = vmul.f32 %v1566, %v1401
    %v1575 = vmul.f32 %v1566, %v1398
    %v1576 = vmul.f32 %v1566, %v1399
    %v1577 = vmul.f32 %v1566, %v1396
    %v1578 = vmul.f32 %v1566, %v1397
    %v1579 = vmul.f32 %v1566, %v1394
    %v1580 = vmul.f32 %v1566, %v1395
    %v1581 = vmul.f32 %v1566, %v1408
    %v1582 = vmul.f32 %v1566, %v1409
    %v1583 = vadd.f32 %v1549, %v1567
    %v1584 = vadd.f32 %v1550, %v1568
    %v1585 = vadd.f32 %v1551, %v1569
    %v1586 = vadd.f32 %v1552, %v1570
    %v1587 = vadd.f32 %v1553, %v1571
    %v1588 = vadd.f32 %v1554, %v1572
    %v1589 = vadd.f32 %v1555, %v1573
    %v1590 = vadd.f32 %v1556, %v1574
    %v1591 = vadd.f32 %v1557, %v1575
    %v1592 = vadd.f32 %v1558, %v1576
    %v1593 = vadd.f32 %v1559, %v1577
    %v1594 = vadd.f32 %v1560, %v1578
    %v1595 = vadd.f32 %v1561, %v1579
    %v1596 = vadd.f32 %v1562, %v1580
    %v1597 = vadd.f32 %v1563, %v1581
    %v1598 = vadd.f32 %v1564, %v1582
    %1599 = vrot.lane.b32.xlu0 %v1583, 127
    %v1600 = vpop.permute.xlu0 %1599
    %1601 = vrot.lane.b32.xlu0 %v1585, 127
    %v1602 = vpop.permute.xlu0 %1601
    %1603 = vrot.lane.b32.xlu0 %v1587, 127
    %v1604 = vpop.permute.xlu0 %1603
    %1605 = vrot.lane.b32.xlu0 %v1589, 127
    %v1606 = vpop.permute.xlu0 %1605
    %1607 = vrot.lane.b32.xlu0 %v1591, 127
    %v1608 = vpop.permute.xlu0 %1607
    %1609 = vrot.lane.b32.xlu0 %v1593, 127
    %v1610 = vpop.permute.xlu0 %1609
    %1611 = vrot.lane.b32.xlu0 %v1595, 127
    %v1612 = vpop.permute.xlu0 %1611
    %1613 = vrot.lane.b32.xlu0 %v1597, 127
    %v1614 = vpop.permute.xlu0 %1613
    %1615 = vrot.lane.b32.xlu0 %v1584, 127
    %v1616 = vpop.permute.xlu0 %1615
    %1617 = vrot.lane.b32.xlu0 %v1586, 127
    %v1618 = vpop.permute.xlu0 %1617
    %1619 = vrot.lane.b32.xlu0 %v1588, 127
    %v1620 = vpop.permute.xlu0 %1619
    %1621 = vrot.lane.b32.xlu0 %v1590, 127
    %v1622 = vpop.permute.xlu0 %1621
    %1623 = vrot.lane.b32.xlu0 %v1592, 127
    %v1624 = vpop.permute.xlu0 %1623
    %1625 = vrot.lane.b32.xlu0 %v1594, 127
    %v1626 = vpop.permute.xlu0 %1625
    %1627 = vrot.lane.b32.xlu0 %v1596, 127
    %v1628 = vpop.permute.xlu0 %1627
    %1629 = vrot.lane.b32.xlu0 %v1598, 127
    %v1630 = vpop.permute.xlu0 %1629
    %v1631 = vsel %vm435, %v1600, %v1616
    %v1632 = vsel %vm435, %v1602, %v1618
    %v1633 = vsel %vm435, %v1604, %v1620
    %v1634 = vsel %vm435, %v1606, %v1622
    %v1635 = vsel %vm435, %v1608, %v1624
    %v1636 = vsel %vm435, %v1610, %v1626
    %v1637 = vsel %vm435, %v1612, %v1628
    %v1638 = vsel %vm435, %v1614, %v1630
    %v1639 = vsel %vm435, %v1616, %v1600
    %v1640 = vsel %vm435, %v1618, %v1602
    %v1641 = vsel %vm435, %v1620, %v1604
    %v1642 = vsel %vm435, %v1622, %v1606
    %v1643 = vsel %vm435, %v1624, %v1608
    %v1644 = vsel %vm435, %v1626, %v1610
    %v1645 = vsel %vm435, %v1628, %v1612
    %v1646 = vsel %vm435, %v1630, %v1614
    %v1647 = vadd.f32 %v1497, %v1631
    %v1648 = vadd.f32 %v1498, %v1639
    %v1649 = vadd.f32 %v1499, %v1632
    %v1650 = vadd.f32 %v1500, %v1640
    %v1651 = vadd.f32 %v1501, %v1633
    %v1652 = vadd.f32 %v1502, %v1641
    %v1653 = vadd.f32 %v1503, %v1634
    %v1654 = vadd.f32 %v1504, %v1642
    %v1655 = vadd.f32 %v1505, %v1635
    %v1656 = vadd.f32 %v1506, %v1643
    %v1657 = vadd.f32 %v1507, %v1636
    %v1658 = vadd.f32 %v1508, %v1644
    %v1659 = vadd.f32 %v1509, %v1637
    %v1660 = vadd.f32 %v1510, %v1645
    %v1661 = vadd.f32 %v1511, %v1638
    %v1662 = vadd.f32 %v1512, %v1646
    %s1663 = sld [smem:[#allocation6 + $0x2]]
    %v1664 = vstv %s1663
    %v1665 = vmul.f32 %v1664, %v126
    %v1666 = vmul.f32 %v1664, %v127
    %v1667 = vmul.f32 %v1664, %v128
    %v1668 = vmul.f32 %v1664, %v129
    %v1669 = vmul.f32 %v1664, %v130
    %v1670 = vmul.f32 %v1664, %v131
    %v1671 = vmul.f32 %v1664, %v132
    %v1672 = vmul.f32 %v1664, %v133
    %v1673 = vmul.f32 %v1664, %v134
    %v1674 = vmul.f32 %v1664, %v135
    %v1675 = vmul.f32 %v1664, %v136
    %v1676 = vmul.f32 %v1664, %v137
    %v1677 = vmul.f32 %v1664, %v138
    %v1678 = vmul.f32 %v1664, %v139
    %v1679 = vmul.f32 %v1664, %v140
    %v1680 = vmul.f32 %v1664, %v141
    %s1681 = sld [smem:[#allocation6 + $0x5]]
    %v1682 = vstv %s1681
    %v1683 = vmul.f32 %v1682, %v1374
    %v1684 = vmul.f32 %v1682, %v1375
    %v1685 = vmul.f32 %v1682, %v1372
    %v1686 = vmul.f32 %v1682, %v1373
    %v1687 = vmul.f32 %v1682, %v1370
    %v1688 = vmul.f32 %v1682, %v1371
    %v1689 = vmul.f32 %v1682, %v1368
    %v1690 = vmul.f32 %v1682, %v1369
    %v1691 = vmul.f32 %v1682, %v1366
    %v1692 = vmul.f32 %v1682, %v1367
    %v1693 = vmul.f32 %v1682, %v1364
    %v1694 = vmul.f32 %v1682, %v1365
    %v1695 = vmul.f32 %v1682, %v1362
    %v1696 = vmul.f32 %v1682, %v1363
    %v1697 = vmul.f32 %v1682, %v1376
    %v1698 = vmul.f32 %v1682, %v1377
    %v1699 = vadd.f32 %v1665, %v1683
    %v1700 = vadd.f32 %v1666, %v1684
    %v1701 = vadd.f32 %v1667, %v1685
    %v1702 = vadd.f32 %v1668, %v1686
    %v1703 = vadd.f32 %v1669, %v1687
    %v1704 = vadd.f32 %v1670, %v1688
    %v1705 = vadd.f32 %v1671, %v1689
    %v1706 = vadd.f32 %v1672, %v1690
    %v1707 = vadd.f32 %v1673, %v1691
    %v1708 = vadd.f32 %v1674, %v1692
    %v1709 = vadd.f32 %v1675, %v1693
    %v1710 = vadd.f32 %v1676, %v1694
    %v1711 = vadd.f32 %v1677, %v1695
    %v1712 = vadd.f32 %v1678, %v1696
    %v1713 = vadd.f32 %v1679, %v1697
    %v1714 = vadd.f32 %v1680, %v1698
    %s1715 = sld [smem:[#allocation6 + $0x8]]
    %v1716 = vstv %s1715
    %v1717 = vmul.f32 %v1716, %v1406
    %v1718 = vmul.f32 %v1716, %v1407
    %v1719 = vmul.f32 %v1716, %v1404
    %v1720 = vmul.f32 %v1716, %v1405
    %v1721 = vmul.f32 %v1716, %v1402
    %v1722 = vmul.f32 %v1716, %v1403
    %v1723 = vmul.f32 %v1716, %v1400
    %v1724 = vmul.f32 %v1716, %v1401
    %v1725 = vmul.f32 %v1716, %v1398
    %v1726 = vmul.f32 %v1716, %v1399
    %v1727 = vmul.f32 %v1716, %v1396
    %v1728 = vmul.f32 %v1716, %v1397
    %v1729 = vmul.f32 %v1716, %v1394
    %v1730 = vmul.f32 %v1716, %v1395
    %v1731 = vmul.f32 %v1716, %v1408
    %v1732 = vmul.f32 %v1716, %v1409
    %v1733 = vadd.f32 %v1699, %v1717
    %v1734 = vadd.f32 %v1700, %v1718
    %v1735 = vadd.f32 %v1701, %v1719
    %v1736 = vadd.f32 %v1702, %v1720
    %v1737 = vadd.f32 %v1703, %v1721
    %v1738 = vadd.f32 %v1704, %v1722
    %v1739 = vadd.f32 %v1705, %v1723
    %v1740 = vadd.f32 %v1706, %v1724
    %v1741 = vadd.f32 %v1707, %v1725
    %v1742 = vadd.f32 %v1708, %v1726
    %v1743 = vadd.f32 %v1709, %v1727
    %v1744 = vadd.f32 %v1710, %v1728
    %v1745 = vadd.f32 %v1711, %v1729
    %v1746 = vadd.f32 %v1712, %v1730
    %v1747 = vadd.f32 %v1713, %v1731
    %v1748 = vadd.f32 %v1714, %v1732
    %1749 = vrot.lane.b32.xlu0 %v1733, 126
    %v1750 = vpop.permute.xlu0 %1749
    %1751 = vrot.lane.b32.xlu0 %v1735, 126
    %v1752 = vpop.permute.xlu0 %1751
    %1753 = vrot.lane.b32.xlu0 %v1737, 126
    %v1754 = vpop.permute.xlu0 %1753
    %1755 = vrot.lane.b32.xlu0 %v1739, 126
    %v1756 = vpop.permute.xlu0 %1755
    %1757 = vrot.lane.b32.xlu0 %v1741, 126
    %v1758 = vpop.permute.xlu0 %1757
    %1759 = vrot.lane.b32.xlu0 %v1743, 126
    %v1760 = vpop.permute.xlu0 %1759
    %1761 = vrot.lane.b32.xlu0 %v1745, 126
    %v1762 = vpop.permute.xlu0 %1761
    %1763 = vrot.lane.b32.xlu0 %v1747, 126
    %v1764 = vpop.permute.xlu0 %1763
    %1765 = vrot.lane.b32.xlu0 %v1734, 126
    %v1766 = vpop.permute.xlu0 %1765
    %1767 = vrot.lane.b32.xlu0 %v1736, 126
    %v1768 = vpop.permute.xlu0 %1767
    %1769 = vrot.lane.b32.xlu0 %v1738, 126
    %v1770 = vpop.permute.xlu0 %1769
    %1771 = vrot.lane.b32.xlu0 %v1740, 126
    %v1772 = vpop.permute.xlu0 %1771
    %1773 = vrot.lane.b32.xlu0 %v1742, 126
    %v1774 = vpop.permute.xlu0 %1773
    %1775 = vrot.lane.b32.xlu0 %v1744, 126
    %v1776 = vpop.permute.xlu0 %1775
    %1777 = vrot.lane.b32.xlu0 %v1746, 126
    %v1778 = vpop.permute.xlu0 %1777
    %1779 = vrot.lane.b32.xlu0 %v1748, 126
    %v1780 = vpop.permute.xlu0 %1779
    %v1781 = vsel %vm586, %v1750, %v1766
    %v1782 = vsel %vm586, %v1752, %v1768
    %v1783 = vsel %vm586, %v1754, %v1770
    %v1784 = vsel %vm586, %v1756, %v1772
    %v1785 = vsel %vm586, %v1758, %v1774
    %v1786 = vsel %vm586, %v1760, %v1776
    %v1787 = vsel %vm586, %v1762, %v1778
    %v1788 = vsel %vm586, %v1764, %v1780
    %v1789 = vsel %vm586, %v1766, %v1750
    %v1790 = vsel %vm586, %v1768, %v1752
    %v1791 = vsel %vm586, %v1770, %v1754
    %v1792 = vsel %vm586, %v1772, %v1756
    %v1793 = vsel %vm586, %v1774, %v1758
    %v1794 = vsel %vm586, %v1776, %v1760
    %v1795 = vsel %vm586, %v1778, %v1762
    %v1796 = vsel %vm586, %v1780, %v1764
    %v1797 = vadd.f32 %v1647, %v1781
    %v1798 = vadd.f32 %v1648, %v1789
    %v1799 = vadd.f32 %v1649, %v1782
    %v1800 = vadd.f32 %v1650, %v1790
    %v1801 = vadd.f32 %v1651, %v1783
    %v1802 = vadd.f32 %v1652, %v1791
    %v1803 = vadd.f32 %v1653, %v1784
    %v1804 = vadd.f32 %v1654, %v1792
    %v1805 = vadd.f32 %v1655, %v1785
    %v1806 = vadd.f32 %v1656, %v1793
    %v1807 = vadd.f32 %v1657, %v1786
    %v1808 = vadd.f32 %v1658, %v1794
    %v1809 = vadd.f32 %v1659, %v1787
    %v1810 = vadd.f32 %v1660, %v1795
    %v1811 = vadd.f32 %v1661, %v1788
    %v1812 = vadd.f32 %v1662, %v1796
    %1813 = vrot.lane.b32.xlu0 %v1797, 127
    %v1814 = vpop.permute.xlu0 %1813
    %1815 = vrot.lane.b32.xlu0 %v1799, 127
    %v1816 = vpop.permute.xlu0 %1815
    %1817 = vrot.lane.b32.xlu0 %v1801, 127
    %v1818 = vpop.permute.xlu0 %1817
    %1819 = vrot.lane.b32.xlu0 %v1803, 127
    %v1820 = vpop.permute.xlu0 %1819
    %1821 = vrot.lane.b32.xlu0 %v1805, 127
    %v1822 = vpop.permute.xlu0 %1821
    %1823 = vrot.lane.b32.xlu0 %v1807, 127
    %v1824 = vpop.permute.xlu0 %1823
    %1825 = vrot.lane.b32.xlu0 %v1809, 127
    %v1826 = vpop.permute.xlu0 %1825
    %1827 = vrot.lane.b32.xlu0 %v1811, 127
    %v1828 = vpop.permute.xlu0 %1827
    %1829 = vrot.lane.b32.xlu0 %v1798, 127
    %v1830 = vpop.permute.xlu0 %1829
    %1831 = vrot.lane.b32.xlu0 %v1800, 127
    %v1832 = vpop.permute.xlu0 %1831
    %1833 = vrot.lane.b32.xlu0 %v1802, 127
    %v1834 = vpop.permute.xlu0 %1833
    %1835 = vrot.lane.b32.xlu0 %v1804, 127
    %v1836 = vpop.permute.xlu0 %1835
    %1837 = vrot.lane.b32.xlu0 %v1806, 127
    %v1838 = vpop.permute.xlu0 %1837
    %1839 = vrot.lane.b32.xlu0 %v1808, 127
    %v1840 = vpop.permute.xlu0 %1839
    %1841 = vrot.lane.b32.xlu0 %v1810, 127
    %v1842 = vpop.permute.xlu0 %1841
    %1843 = vrot.lane.b32.xlu0 %v1812, 127
    %v1844 = vpop.permute.xlu0 %1843
    %v1845 = vsel %vm435, %v1814, %v1830
    %v1846 = vsel %vm435, %v1816, %v1832
    %v1847 = vsel %vm435, %v1818, %v1834
    %v1848 = vsel %vm435, %v1820, %v1836
    %v1849 = vsel %vm435, %v1822, %v1838
    %v1850 = vsel %vm435, %v1824, %v1840
    %v1851 = vsel %vm435, %v1826, %v1842
    %v1852 = vsel %vm435, %v1828, %v1844
    %v1853 = vsel %vm435, %v1830, %v1814
    %v1854 = vsel %vm435, %v1832, %v1816
    %v1855 = vsel %vm435, %v1834, %v1818
    %v1856 = vsel %vm435, %v1836, %v1820
    %v1857 = vsel %vm435, %v1838, %v1822
    %v1858 = vsel %vm435, %v1840, %v1824
    %v1859 = vsel %vm435, %v1842, %v1826
    %v1860 = vsel %vm435, %v1844, %v1828
    %v1861 = vmax.f32 %v1797, %v1845
    %v1862 = vmax.f32 %v1798, %v1853
    %v1863 = vmax.f32 %v1799, %v1846
    %v1864 = vmax.f32 %v1800, %v1854
    %v1865 = vmax.f32 %v1801, %v1847
    %v1866 = vmax.f32 %v1802, %v1855
    %v1867 = vmax.f32 %v1803, %v1848
    %v1868 = vmax.f32 %v1804, %v1856
    %v1869 = vmax.f32 %v1805, %v1849
    %v1870 = vmax.f32 %v1806, %v1857
    %v1871 = vmax.f32 %v1807, %v1850
    %v1872 = vmax.f32 %v1808, %v1858
    %v1873 = vmax.f32 %v1809, %v1851
    %v1874 = vmax.f32 %v1810, %v1859
    %v1875 = vmax.f32 %v1811, %v1852
    %v1876 = vmax.f32 %v1812, %v1860
    %v1877 = vrot.slane %v1861, 1
    %v1878 = vrot.slane %v1862, 1
    %v1879 = vrot.slane %v1863, 1
    %v1880 = vrot.slane %v1864, 1
    %v1881 = vrot.slane %v1865, 1
    %v1882 = vrot.slane %v1866, 1
    %v1883 = vrot.slane %v1867, 1
    %v1884 = vrot.slane %v1868, 1
    %v1885 = vrot.slane %v1869, 1
    %v1886 = vrot.slane %v1870, 1
    %v1887 = vrot.slane %v1871, 1
    %v1888 = vrot.slane %v1872, 1
    %v1889 = vrot.slane %v1873, 1
    %v1890 = vrot.slane %v1874, 1
    %v1891 = vrot.slane %v1875, 1
    %v1892 = vrot.slane %v1876, 1
    %v1893 = vsel %vm162, %v1889, %v1891
    %v1894 = vsel %vm162, %v1890, %v1892
    %v1895 = vsel %vm162, %v1887, %v1889
    %v1896 = vsel %vm162, %v1888, %v1890
    %v1897 = vsel %vm162, %v1885, %v1887
    %v1898 = vsel %vm162, %v1886, %v1888
    %v1899 = vsel %vm162, %v1883, %v1885
    %v1900 = vsel %vm162, %v1884, %v1886
    %v1901 = vsel %vm162, %v1881, %v1883
    %v1902 = vsel %vm162, %v1882, %v1884
    %v1903 = vsel %vm162, %v1879, %v1881
    %v1904 = vsel %vm162, %v1880, %v1882
    %v1905 = vsel %vm162, %v1877, %v1879
    %v1906 = vsel %vm162, %v1878, %v1880
    %v1907 = vsel %vm162, %v1891, %v1877
    %v1908 = vsel %vm162, %v1892, %v1878
    %v1909 = vmax.f32 %v1861, %v1905
    %v1910 = vmax.f32 %v1862, %v1906
    %v1911 = vmax.f32 %v1863, %v1903
    %v1912 = vmax.f32 %v1864, %v1904
    %v1913 = vmax.f32 %v1865, %v1901
    %v1914 = vmax.f32 %v1866, %v1902
    %v1915 = vmax.f32 %v1867, %v1899
    %v1916 = vmax.f32 %v1868, %v1900
    %v1917 = vmax.f32 %v1869, %v1897
    %v1918 = vmax.f32 %v1870, %v1898
    %v1919 = vmax.f32 %v1871, %v1895
    %v1920 = vmax.f32 %v1872, %v1896
    %v1921 = vmax.f32 %v1873, %v1893
    %v1922 = vmax.f32 %v1874, %v1894
    %v1923 = vmax.f32 %v1875, %v1907
    %v1924 = vmax.f32 %v1876, %v1908
    %v1925 = vmax.f32 %v1909, 0.0
    %v1926 = vmax.f32 %v1910, 0.0
    %v1927 = vmax.f32 %v1911, 0.0
    %v1928 = vmax.f32 %v1912, 0.0
    %v1929 = vmax.f32 %v1913, 0.0
    %v1930 = vmax.f32 %v1914, 0.0
    %v1931 = vmax.f32 %v1915, 0.0
    %v1932 = vmax.f32 %v1916, 0.0
    %v1933 = vmax.f32 %v1917, 0.0
    %v1934 = vmax.f32 %v1918, 0.0
    %v1935 = vmax.f32 %v1919, 0.0
    %v1936 = vmax.f32 %v1920, 0.0
    %v1937 = vmax.f32 %v1921, 0.0
    %v1938 = vmax.f32 %v1922, 0.0
    %v1939 = vmax.f32 %v1923, 0.0
    %v1940 = vmax.f32 %v1924, 0.0
    %v1941 = vrot.slane %v1925, 2
    %v1942 = vrot.slane %v1926, 2
    %v1943 = vrot.slane %v1927, 2
    %v1944 = vrot.slane %v1928, 2
    %v1945 = vrot.slane %v1929, 2
    %v1946 = vrot.slane %v1930, 2
    %v1947 = vrot.slane %v1931, 2
    %v1948 = vrot.slane %v1932, 2
    %v1949 = vrot.slane %v1933, 2
    %v1950 = vrot.slane %v1934, 2
    %v1951 = vrot.slane %v1935, 2
    %v1952 = vrot.slane %v1936, 2
    %v1953 = vrot.slane %v1937, 2
    %v1954 = vrot.slane %v1938, 2
    %v1955 = vrot.slane %v1939, 2
    %v1956 = vrot.slane %v1940, 2
    %v1957 = vsel %vm195, %v1953, %v1955
    %v1958 = vsel %vm195, %v1954, %v1956
    %v1959 = vsel %vm195, %v1951, %v1953
    %v1960 = vsel %vm195, %v1952, %v1954
    %v1961 = vsel %vm195, %v1949, %v1951
    %v1962 = vsel %vm195, %v1950, %v1952
    %v1963 = vsel %vm195, %v1947, %v1949
    %v1964 = vsel %vm195, %v1948, %v1950
    %v1965 = vsel %vm195, %v1945, %v1947
    %v1966 = vsel %vm195, %v1946, %v1948
    %v1967 = vsel %vm195, %v1943, %v1945
    %v1968 = vsel %vm195, %v1944, %v1946
    %v1969 = vsel %vm195, %v1941, %v1943
    %v1970 = vsel %vm195, %v1942, %v1944
    %v1971 = vsel %vm195, %v1955, %v1941
    %v1972 = vsel %vm195, %v1956, %v1942
    %v1973 = vrot.slane %v1925, 4
    %v1974 = vrot.slane %v1926, 4
    %v1975 = vrot.slane %v1927, 4
    %v1976 = vrot.slane %v1928, 4
    %v1977 = vrot.slane %v1929, 4
    %v1978 = vrot.slane %v1930, 4
    %v1979 = vrot.slane %v1931, 4
    %v1980 = vrot.slane %v1932, 4
    %v1981 = vrot.slane %v1933, 4
    %v1982 = vrot.slane %v1934, 4
    %v1983 = vrot.slane %v1935, 4
    %v1984 = vrot.slane %v1936, 4
    %v1985 = vrot.slane %v1937, 4
    %v1986 = vrot.slane %v1938, 4
    %v1987 = vrot.slane %v1939, 4
    %v1988 = vrot.slane %v1940, 4
    %v1989 = vsel %vm795, %v1985, %v1987
    %v1990 = vsel %vm795, %v1986, %v1988
    %v1991 = vsel %vm795, %v1983, %v1985
    %v1992 = vsel %vm795, %v1984, %v1986
    %v1993 = vsel %vm795, %v1981, %v1983
    %v1994 = vsel %vm795, %v1982, %v1984
    %v1995 = vsel %vm795, %v1979, %v1981
    %v1996 = vsel %vm795, %v1980, %v1982
    %v1997 = vsel %vm795, %v1977, %v1979
    %v1998 = vsel %vm795, %v1978, %v1980
    %v1999 = vsel %vm795, %v1975, %v1977
    %v2000 = vsel %vm795, %v1976, %v1978
    %v2001 = vsel %vm795, %v1973, %v1975
    %v2002 = vsel %vm795, %v1974, %v1976
    %v2003 = vsel %vm795, %v1987, %v1973
    %v2004 = vsel %vm795, %v1988, %v1974
    %s2005 = sld [smem:[#allocation7]]
    %v2006 = vstv %s2005
    %v2007 = vmul.f32 %v2006, %v1925
    %v2008 = vmul.f32 %v2006, %v1926
    %v2009 = vmul.f32 %v2006, %v1927
    %v2010 = vmul.f32 %v2006, %v1928
    %v2011 = vmul.f32 %v2006, %v1929
    %v2012 = vmul.f32 %v2006, %v1930
    %v2013 = vmul.f32 %v2006, %v1931
    %v2014 = vmul.f32 %v2006, %v1932
    %v2015 = vmul.f32 %v2006, %v1933
    %v2016 = vmul.f32 %v2006, %v1934
    %v2017 = vmul.f32 %v2006, %v1935
    %v2018 = vmul.f32 %v2006, %v1936
    %v2019 = vmul.f32 %v2006, %v1937
    %v2020 = vmul.f32 %v2006, %v1938
    %v2021 = vmul.f32 %v2006, %v1939
    %v2022 = vmul.f32 %v2006, %v1940
    %s2023 = sld [smem:[#allocation7 + $0x3]]
    %v2024 = vstv %s2023
    %v2025 = vmul.f32 %v2024, %v1969
    %v2026 = vmul.f32 %v2024, %v1970
    %v2027 = vmul.f32 %v2024, %v1967
    %v2028 = vmul.f32 %v2024, %v1968
    %v2029 = vmul.f32 %v2024, %v1965
    %v2030 = vmul.f32 %v2024, %v1966
    %v2031 = vmul.f32 %v2024, %v1963
    %v2032 = vmul.f32 %v2024, %v1964
    %v2033 = vmul.f32 %v2024, %v1961
    %v2034 = vmul.f32 %v2024, %v1962
    %v2035 = vmul.f32 %v2024, %v1959
    %v2036 = vmul.f32 %v2024, %v1960
    %v2037 = vmul.f32 %v2024, %v1957
    %v2038 = vmul.f32 %v2024, %v1958
    %v2039 = vmul.f32 %v2024, %v1971
    %v2040 = vmul.f32 %v2024, %v1972
    %v2041 = vadd.f32 %v2007, %v2025
    %v2042 = vadd.f32 %v2008, %v2026
    %v2043 = vadd.f32 %v2009, %v2027
    %v2044 = vadd.f32 %v2010, %v2028
    %v2045 = vadd.f32 %v2011, %v2029
    %v2046 = vadd.f32 %v2012, %v2030
    %v2047 = vadd.f32 %v2013, %v2031
    %v2048 = vadd.f32 %v2014, %v2032
    %v2049 = vadd.f32 %v2015, %v2033
    %v2050 = vadd.f32 %v2016, %v2034
    %v2051 = vadd.f32 %v2017, %v2035
    %v2052 = vadd.f32 %v2018, %v2036
    %v2053 = vadd.f32 %v2019, %v2037
    %v2054 = vadd.f32 %v2020, %v2038
    %v2055 = vadd.f32 %v2021, %v2039
    %v2056 = vadd.f32 %v2022, %v2040
    %s2057 = sld [smem:[#allocation7 + $0x6]]
    %v2058 = vstv %s2057
    %v2059 = vmul.f32 %v2058, %v2001
    %v2060 = vmul.f32 %v2058, %v2002
    %v2061 = vmul.f32 %v2058, %v1999
    %v2062 = vmul.f32 %v2058, %v2000
    %v2063 = vmul.f32 %v2058, %v1997
    %v2064 = vmul.f32 %v2058, %v1998
    %v2065 = vmul.f32 %v2058, %v1995
    %v2066 = vmul.f32 %v2058, %v1996
    %v2067 = vmul.f32 %v2058, %v1993
    %v2068 = vmul.f32 %v2058, %v1994
    %v2069 = vmul.f32 %v2058, %v1991
    %v2070 = vmul.f32 %v2058, %v1992
    %v2071 = vmul.f32 %v2058, %v1989
    %v2072 = vmul.f32 %v2058, %v1990
    %v2073 = vmul.f32 %v2058, %v2003
    %v2074 = vmul.f32 %v2058, %v2004
    %v2075 = vadd.f32 %v2041, %v2059
    %v2076 = vadd.f32 %v2042, %v2060
    %v2077 = vadd.f32 %v2043, %v2061
    %v2078 = vadd.f32 %v2044, %v2062
    %v2079 = vadd.f32 %v2045, %v2063
    %v2080 = vadd.f32 %v2046, %v2064
    %v2081 = vadd.f32 %v2047, %v2065
    %v2082 = vadd.f32 %v2048, %v2066
    %v2083 = vadd.f32 %v2049, %v2067
    %v2084 = vadd.f32 %v2050, %v2068
    %v2085 = vadd.f32 %v2051, %v2069
    %v2086 = vadd.f32 %v2052, %v2070
    %v2087 = vadd.f32 %v2053, %v2071
    %v2088 = vadd.f32 %v2054, %v2072
    %v2089 = vadd.f32 %v2055, %v2073
    %v2090 = vadd.f32 %v2056, %v2074
    %v2091 = vstv %s1345
    %v2092 = vadd.f32 %v2075, %v2091
    %v2093 = vadd.f32 %v2076, %v2091
    %v2094 = vadd.f32 %v2077, %v2091
    %v2095 = vadd.f32 %v2078, %v2091
    %v2096 = vadd.f32 %v2079, %v2091
    %v2097 = vadd.f32 %v2080, %v2091
    %v2098 = vadd.f32 %v2081, %v2091
    %v2099 = vadd.f32 %v2082, %v2091
    %v2100 = vadd.f32 %v2083, %v2091
    %v2101 = vadd.f32 %v2084, %v2091
    %v2102 = vadd.f32 %v2085, %v2091
    %v2103 = vadd.f32 %v2086, %v2091
    %v2104 = vadd.f32 %v2087, %v2091
    %v2105 = vadd.f32 %v2088, %v2091
    %v2106 = vadd.f32 %v2089, %v2091
    %v2107 = vadd.f32 %v2090, %v2091
    %s2108 = sld [smem:[#allocation7 + $0x1]]
    %v2109 = vstv %s2108
    %v2110 = vmul.f32 %v2109, %v1925
    %v2111 = vmul.f32 %v2109, %v1926
    %v2112 = vmul.f32 %v2109, %v1927
    %v2113 = vmul.f32 %v2109, %v1928
    %v2114 = vmul.f32 %v2109, %v1929
    %v2115 = vmul.f32 %v2109, %v1930
    %v2116 = vmul.f32 %v2109, %v1931
    %v2117 = vmul.f32 %v2109, %v1932
    %v2118 = vmul.f32 %v2109, %v1933
    %v2119 = vmul.f32 %v2109, %v1934
    %v2120 = vmul.f32 %v2109, %v1935
    %v2121 = vmul.f32 %v2109, %v1936
    %v2122 = vmul.f32 %v2109, %v1937
    %v2123 = vmul.f32 %v2109, %v1938
    %v2124 = vmul.f32 %v2109, %v1939
    %v2125 = vmul.f32 %v2109, %v1940
    %s2126 = sld [smem:[#allocation7 + $0x4]]
    %v2127 = vstv %s2126
    %v2128 = vmul.f32 %v2127, %v1969
    %v2129 = vmul.f32 %v2127, %v1970
    %v2130 = vmul.f32 %v2127, %v1967
    %v2131 = vmul.f32 %v2127, %v1968
    %v2132 = vmul.f32 %v2127, %v1965
    %v2133 = vmul.f32 %v2127, %v1966
    %v2134 = vmul.f32 %v2127, %v1963
    %v2135 = vmul.f32 %v2127, %v1964
    %v2136 = vmul.f32 %v2127, %v1961
    %v2137 = vmul.f32 %v2127, %v1962
    %v2138 = vmul.f32 %v2127, %v1959
    %v2139 = vmul.f32 %v2127, %v1960
    %v2140 = vmul.f32 %v2127, %v1957
    %v2141 = vmul.f32 %v2127, %v1958
    %v2142 = vmul.f32 %v2127, %v1971
    %v2143 = vmul.f32 %v2127, %v1972
    %v2144 = vadd.f32 %v2110, %v2128
    %v2145 = vadd.f32 %v2111, %v2129
    %v2146 = vadd.f32 %v2112, %v2130
    %v2147 = vadd.f32 %v2113, %v2131
    %v2148 = vadd.f32 %v2114, %v2132
    %v2149 = vadd.f32 %v2115, %v2133
    %v2150 = vadd.f32 %v2116, %v2134
    %v2151 = vadd.f32 %v2117, %v2135
    %v2152 = vadd.f32 %v2118, %v2136
    %v2153 = vadd.f32 %v2119, %v2137
    %v2154 = vadd.f32 %v2120, %v2138
    %v2155 = vadd.f32 %v2121, %v2139
    %v2156 = vadd.f32 %v2122, %v2140
    %v2157 = vadd.f32 %v2123, %v2141
    %v2158 = vadd.f32 %v2124, %v2142
    %v2159 = vadd.f32 %v2125, %v2143
    %s2160 = sld [smem:[#allocation7 + $0x7]]
    %v2161 = vstv %s2160
    %v2162 = vmul.f32 %v2161, %v2001
    %v2163 = vmul.f32 %v2161, %v2002
    %v2164 = vmul.f32 %v2161, %v1999
    %v2165 = vmul.f32 %v2161, %v2000
    %v2166 = vmul.f32 %v2161, %v1997
    %v2167 = vmul.f32 %v2161, %v1998
    %v2168 = vmul.f32 %v2161, %v1995
    %v2169 = vmul.f32 %v2161, %v1996
    %v2170 = vmul.f32 %v2161, %v1993
    %v2171 = vmul.f32 %v2161, %v1994
    %v2172 = vmul.f32 %v2161, %v1991
    %v2173 = vmul.f32 %v2161, %v1992
    %v2174 = vmul.f32 %v2161, %v1989
    %v2175 = vmul.f32 %v2161, %v1990
    %v2176 = vmul.f32 %v2161, %v2003
    %v2177 = vmul.f32 %v2161, %v2004
    %v2178 = vadd.f32 %v2144, %v2162
    %v2179 = vadd.f32 %v2145, %v2163
    %v2180 = vadd.f32 %v2146, %v2164
    %v2181 = vadd.f32 %v2147, %v2165
    %v2182 = vadd.f32 %v2148, %v2166
    %v2183 = vadd.f32 %v2149, %v2167
    %v2184 = vadd.f32 %v2150, %v2168
    %v2185 = vadd.f32 %v2151, %v2169
    %v2186 = vadd.f32 %v2152, %v2170
    %v2187 = vadd.f32 %v2153, %v2171
    %v2188 = vadd.f32 %v2154, %v2172
    %v2189 = vadd.f32 %v2155, %v2173
    %v2190 = vadd.f32 %v2156, %v2174
    %v2191 = vadd.f32 %v2157, %v2175
    %v2192 = vadd.f32 %v2158, %v2176
    %v2193 = vadd.f32 %v2159, %v2177
    %2194 = vrot.lane.b32.xlu0 %v2178, 126
    %v2195 = vpop.permute.xlu0 %2194
    %2196 = vrot.lane.b32.xlu0 %v2180, 126
    %v2197 = vpop.permute.xlu0 %2196
    %2198 = vrot.lane.b32.xlu0 %v2182, 126
    %v2199 = vpop.permute.xlu0 %2198
    %2200 = vrot.lane.b32.xlu0 %v2184, 126
    %v2201 = vpop.permute.xlu0 %2200
    %2202 = vrot.lane.b32.xlu0 %v2186, 126
    %v2203 = vpop.permute.xlu0 %2202
    %2204 = vrot.lane.b32.xlu0 %v2188, 126
    %v2205 = vpop.permute.xlu0 %2204
    %2206 = vrot.lane.b32.xlu0 %v2190, 126
    %v2207 = vpop.permute.xlu0 %2206
    %2208 = vrot.lane.b32.xlu0 %v2192, 126
    %v2209 = vpop.permute.xlu0 %2208
    %2210 = vrot.lane.b32.xlu0 %v2179, 126
    %v2211 = vpop.permute.xlu0 %2210
    %2212 = vrot.lane.b32.xlu0 %v2181, 126
    %v2213 = vpop.permute.xlu0 %2212
    %2214 = vrot.lane.b32.xlu0 %v2183, 126
    %v2215 = vpop.permute.xlu0 %2214
    %2216 = vrot.lane.b32.xlu0 %v2185, 126
    %v2217 = vpop.permute.xlu0 %2216
    %2218 = vrot.lane.b32.xlu0 %v2187, 126
    %v2219 = vpop.permute.xlu0 %2218
    %2220 = vrot.lane.b32.xlu0 %v2189, 126
    %v2221 = vpop.permute.xlu0 %2220
    %2222 = vrot.lane.b32.xlu0 %v2191, 126
    %v2223 = vpop.permute.xlu0 %2222
    %2224 = vrot.lane.b32.xlu0 %v2193, 126
    %v2225 = vpop.permute.xlu0 %2224
    %v2226 = vsel %vm586, %v2195, %v2211
    %v2227 = vsel %vm586, %v2197, %v2213
    %v2228 = vsel %vm586, %v2199, %v2215
    %v2229 = vsel %vm586, %v2201, %v2217
    %v2230 = vsel %vm586, %v2203, %v2219
    %v2231 = vsel %vm586, %v2205, %v2221
    %v2232 = vsel %vm586, %v2207, %v2223
    %v2233 = vsel %vm586, %v2209, %v2225
    %v2234 = vsel %vm586, %v2211, %v2195
    %v2235 = vsel %vm586, %v2213, %v2197
    %v2236 = vsel %vm586, %v2215, %v2199
    %v2237 = vsel %vm586, %v2217, %v2201
    %v2238 = vsel %vm586, %v2219, %v2203
    %v2239 = vsel %vm586, %v2221, %v2205
    %v2240 = vsel %vm586, %v2223, %v2207
    %v2241 = vsel %vm586, %v2225, %v2209
    %v2242 = vadd.f32 %v2092, %v2226
    %v2243 = vadd.f32 %v2093, %v2234
    %v2244 = vadd.f32 %v2094, %v2227
    %v2245 = vadd.f32 %v2095, %v2235
    %v2246 = vadd.f32 %v2096, %v2228
    %v2247 = vadd.f32 %v2097, %v2236
    %v2248 = vadd.f32 %v2098, %v2229
    %v2249 = vadd.f32 %v2099, %v2237
    %v2250 = vadd.f32 %v2100, %v2230
    %v2251 = vadd.f32 %v2101, %v2238
    %v2252 = vadd.f32 %v2102, %v2231
    %v2253 = vadd.f32 %v2103, %v2239
    %v2254 = vadd.f32 %v2104, %v2232
    %v2255 = vadd.f32 %v2105, %v2240
    %v2256 = vadd.f32 %v2106, %v2233
    %v2257 = vadd.f32 %v2107, %v2241
    %s2258 = sld [smem:[#allocation7 + $0x2]]
    %v2259 = vstv %s2258
    %v2260 = vmul.f32 %v2259, %v1925
    %v2261 = vmul.f32 %v2259, %v1926
    %v2262 = vmul.f32 %v2259, %v1927
    %v2263 = vmul.f32 %v2259, %v1928
    %v2264 = vmul.f32 %v2259, %v1929
    %v2265 = vmul.f32 %v2259, %v1930
    %v2266 = vmul.f32 %v2259, %v1931
    %v2267 = vmul.f32 %v2259, %v1932
    %v2268 = vmul.f32 %v2259, %v1933
    %v2269 = vmul.f32 %v2259, %v1934
    %v2270 = vmul.f32 %v2259, %v1935
    %v2271 = vmul.f32 %v2259, %v1936
    %v2272 = vmul.f32 %v2259, %v1937
    %v2273 = vmul.f32 %v2259, %v1938
    %v2274 = vmul.f32 %v2259, %v1939
    %v2275 = vmul.f32 %v2259, %v1940
    %s2276 = sld [smem:[#allocation7 + $0x5]]
    %v2277 = vstv %s2276
    %v2278 = vmul.f32 %v2277, %v1969
    %v2279 = vmul.f32 %v2277, %v1970
    %v2280 = vmul.f32 %v2277, %v1967
    %v2281 = vmul.f32 %v2277, %v1968
    %v2282 = vmul.f32 %v2277, %v1965
    %v2283 = vmul.f32 %v2277, %v1966
    %v2284 = vmul.f32 %v2277, %v1963
    %v2285 = vmul.f32 %v2277, %v1964
    %v2286 = vmul.f32 %v2277, %v1961
    %v2287 = vmul.f32 %v2277, %v1962
    %v2288 = vmul.f32 %v2277, %v1959
    %v2289 = vmul.f32 %v2277, %v1960
    %v2290 = vmul.f32 %v2277, %v1957
    %v2291 = vmul.f32 %v2277, %v1958
    %v2292 = vmul.f32 %v2277, %v1971
    %v2293 = vmul.f32 %v2277, %v1972
    %v2294 = vadd.f32 %v2260, %v2278
    %v2295 = vadd.f32 %v2261, %v2279
    %v2296 = vadd.f32 %v2262, %v2280
    %v2297 = vadd.f32 %v2263, %v2281
    %v2298 = vadd.f32 %v2264, %v2282
    %v2299 = vadd.f32 %v2265, %v2283
    %v2300 = vadd.f32 %v2266, %v2284
    %v2301 = vadd.f32 %v2267, %v2285
    %v2302 = vadd.f32 %v2268, %v2286
    %v2303 = vadd.f32 %v2269, %v2287
    %v2304 = vadd.f32 %v2270, %v2288
    %v2305 = vadd.f32 %v2271, %v2289
    %v2306 = vadd.f32 %v2272, %v2290
    %v2307 = vadd.f32 %v2273, %v2291
    %v2308 = vadd.f32 %v2274, %v2292
    %v2309 = vadd.f32 %v2275, %v2293
    %s2310 = sld [smem:[#allocation7 + $0x8]]
    %v2311 = vstv %s2310
    %v2312 = vmul.f32 %v2311, %v2001
    %v2313 = vmul.f32 %v2311, %v2002
    %v2314 = vmul.f32 %v2311, %v1999
    %v2315 = vmul.f32 %v2311, %v2000
    %v2316 = vmul.f32 %v2311, %v1997
    %v2317 = vmul.f32 %v2311, %v1998
    %v2318 = vmul.f32 %v2311, %v1995
    %v2319 = vmul.f32 %v2311, %v1996
    %v2320 = vmul.f32 %v2311, %v1993
    %v2321 = vmul.f32 %v2311, %v1994
    %v2322 = vmul.f32 %v2311, %v1991
    %v2323 = vmul.f32 %v2311, %v1992
    %v2324 = vmul.f32 %v2311, %v1989
    %v2325 = vmul.f32 %v2311, %v1990
    %v2326 = vmul.f32 %v2311, %v2003
    %v2327 = vmul.f32 %v2311, %v2004
    %v2328 = vadd.f32 %v2294, %v2312
    %v2329 = vadd.f32 %v2295, %v2313
    %v2330 = vadd.f32 %v2296, %v2314
    %v2331 = vadd.f32 %v2297, %v2315
    %v2332 = vadd.f32 %v2298, %v2316
    %v2333 = vadd.f32 %v2299, %v2317
    %v2334 = vadd.f32 %v2300, %v2318
    %v2335 = vadd.f32 %v2301, %v2319
    %v2336 = vadd.f32 %v2302, %v2320
    %v2337 = vadd.f32 %v2303, %v2321
    %v2338 = vadd.f32 %v2304, %v2322
    %v2339 = vadd.f32 %v2305, %v2323
    %v2340 = vadd.f32 %v2306, %v2324
    %v2341 = vadd.f32 %v2307, %v2325
    %v2342 = vadd.f32 %v2308, %v2326
    %v2343 = vadd.f32 %v2309, %v2327
    %2344 = vrot.lane.b32.xlu0 %v2328, 124
    %v2345 = vpop.permute.xlu0 %2344
    %2346 = vrot.lane.b32.xlu0 %v2330, 124
    %v2347 = vpop.permute.xlu0 %2346
    %2348 = vrot.lane.b32.xlu0 %v2332, 124
    %v2349 = vpop.permute.xlu0 %2348
    %2350 = vrot.lane.b32.xlu0 %v2334, 124
    %v2351 = vpop.permute.xlu0 %2350
    %2352 = vrot.lane.b32.xlu0 %v2336, 124
    %v2353 = vpop.permute.xlu0 %2352
    %2354 = vrot.lane.b32.xlu0 %v2338, 124
    %v2355 = vpop.permute.xlu0 %2354
    %2356 = vrot.lane.b32.xlu0 %v2340, 124
    %v2357 = vpop.permute.xlu0 %2356
    %2358 = vrot.lane.b32.xlu0 %v2342, 124
    %v2359 = vpop.permute.xlu0 %2358
    %2360 = vrot.lane.b32.xlu0 %v2329, 124
    %v2361 = vpop.permute.xlu0 %2360
    %2362 = vrot.lane.b32.xlu0 %v2331, 124
    %v2363 = vpop.permute.xlu0 %2362
    %2364 = vrot.lane.b32.xlu0 %v2333, 124
    %v2365 = vpop.permute.xlu0 %2364
    %2366 = vrot.lane.b32.xlu0 %v2335, 124
    %v2367 = vpop.permute.xlu0 %2366
    %2368 = vrot.lane.b32.xlu0 %v2337, 124
    %v2369 = vpop.permute.xlu0 %2368
    %2370 = vrot.lane.b32.xlu0 %v2339, 124
    %v2371 = vpop.permute.xlu0 %2370
    %2372 = vrot.lane.b32.xlu0 %v2341, 124
    %v2373 = vpop.permute.xlu0 %2372
    %2374 = vrot.lane.b32.xlu0 %v2343, 124
    %v2375 = vpop.permute.xlu0 %2374
    %v2376 = vsel %vm1183, %v2345, %v2361
    %v2377 = vsel %vm1183, %v2347, %v2363
    %v2378 = vsel %vm1183, %v2349, %v2365
    %v2379 = vsel %vm1183, %v2351, %v2367
    %v2380 = vsel %vm1183, %v2353, %v2369
    %v2381 = vsel %vm1183, %v2355, %v2371
    %v2382 = vsel %vm1183, %v2357, %v2373
    %v2383 = vsel %vm1183, %v2359, %v2375
    %v2384 = vsel %vm1183, %v2361, %v2345
    %v2385 = vsel %vm1183, %v2363, %v2347
    %v2386 = vsel %vm1183, %v2365, %v2349
    %v2387 = vsel %vm1183, %v2367, %v2351
    %v2388 = vsel %vm1183, %v2369, %v2353
    %v2389 = vsel %vm1183, %v2371, %v2355
    %v2390 = vsel %vm1183, %v2373, %v2357
    %v2391 = vsel %vm1183, %v2375, %v2359
    %v2392 = vadd.f32 %v2242, %v2376
    %v2393 = vadd.f32 %v2243, %v2384
    %v2394 = vadd.f32 %v2244, %v2377
    %v2395 = vadd.f32 %v2245, %v2385
    %v2396 = vadd.f32 %v2246, %v2378
    %v2397 = vadd.f32 %v2247, %v2386
    %v2398 = vadd.f32 %v2248, %v2379
    %v2399 = vadd.f32 %v2249, %v2387
    %v2400 = vadd.f32 %v2250, %v2380
    %v2401 = vadd.f32 %v2251, %v2388
    %v2402 = vadd.f32 %v2252, %v2381
    %v2403 = vadd.f32 %v2253, %v2389
    %v2404 = vadd.f32 %v2254, %v2382
    %v2405 = vadd.f32 %v2255, %v2390
    %v2406 = vadd.f32 %v2256, %v2383
    %v2407 = vadd.f32 %v2257, %v2391
    %2408 = vrot.lane.b32.xlu0 %v2392, 126
    %v2409 = vpop.permute.xlu0 %2408
    %2410 = vrot.lane.b32.xlu0 %v2394, 126
    %v2411 = vpop.permute.xlu0 %2410
    %2412 = vrot.lane.b32.xlu0 %v2396, 126
    %v2413 = vpop.permute.xlu0 %2412
    %2414 = vrot.lane.b32.xlu0 %v2398, 126
    %v2415 = vpop.permute.xlu0 %2414
    %2416 = vrot.lane.b32.xlu0 %v2400, 126
    %v2417 = vpop.permute.xlu0 %2416
    %2418 = vrot.lane.b32.xlu0 %v2402, 126
    %v2419 = vpop.permute.xlu0 %2418
    %2420 = vrot.lane.b32.xlu0 %v2404, 126
    %v2421 = vpop.permute.xlu0 %2420
    %2422 = vrot.lane.b32.xlu0 %v2406, 126
    %v2423 = vpop.permute.xlu0 %2422
    %2424 = vrot.lane.b32.xlu0 %v2393, 126
    %v2425 = vpop.permute.xlu0 %2424
    %2426 = vrot.lane.b32.xlu0 %v2395, 126
    %v2427 = vpop.permute.xlu0 %2426
    %2428 = vrot.lane.b32.xlu0 %v2397, 126
    %v2429 = vpop.permute.xlu0 %2428
    %2430 = vrot.lane.b32.xlu0 %v2399, 126
    %v2431 = vpop.permute.xlu0 %2430
    %2432 = vrot.lane.b32.xlu0 %v2401, 126
    %v2433 = vpop.permute.xlu0 %2432
    %2434 = vrot.lane.b32.xlu0 %v2403, 126
    %v2435 = vpop.permute.xlu0 %2434
    %2436 = vrot.lane.b32.xlu0 %v2405, 126
    %v2437 = vpop.permute.xlu0 %2436
    %2438 = vrot.lane.b32.xlu0 %v2407, 126
    %v2439 = vpop.permute.xlu0 %2438
    %v2440 = vsel %vm586, %v2409, %v2425
    %v2441 = vsel %vm586, %v2411, %v2427
    %v2442 = vsel %vm586, %v2413, %v2429
    %v2443 = vsel %vm586, %v2415, %v2431
    %v2444 = vsel %vm586, %v2417, %v2433
    %v2445 = vsel %vm586, %v2419, %v2435
    %v2446 = vsel %vm586, %v2421, %v2437
    %v2447 = vsel %vm586, %v2423, %v2439
    %v2448 = vsel %vm586, %v2425, %v2409
    %v2449 = vsel %vm586, %v2427, %v2411
    %v2450 = vsel %vm586, %v2429, %v2413
    %v2451 = vsel %vm586, %v2431, %v2415
    %v2452 = vsel %vm586, %v2433, %v2417
    %v2453 = vsel %vm586, %v2435, %v2419
    %v2454 = vsel %vm586, %v2437, %v2421
    %v2455 = vsel %vm586, %v2439, %v2423
    %v2456 = vmax.f32 %v2392, %v2440
    %v2457 = vmax.f32 %v2393, %v2448
    %v2458 = vmax.f32 %v2394, %v2441
    %v2459 = vmax.f32 %v2395, %v2449
    %v2460 = vmax.f32 %v2396, %v2442
    %v2461 = vmax.f32 %v2397, %v2450
    %v2462 = vmax.f32 %v2398, %v2443
    %v2463 = vmax.f32 %v2399, %v2451
    %v2464 = vmax.f32 %v2400, %v2444
    %v2465 = vmax.f32 %v2401, %v2452
    %v2466 = vmax.f32 %v2402, %v2445
    %v2467 = vmax.f32 %v2403, %v2453
    %v2468 = vmax.f32 %v2404, %v2446
    %v2469 = vmax.f32 %v2405, %v2454
    %v2470 = vmax.f32 %v2406, %v2447
    %v2471 = vmax.f32 %v2407, %v2455
    %v2472 = vrot.slane %v2456, 2
    %v2473 = vrot.slane %v2457, 2
    %v2474 = vrot.slane %v2458, 2
    %v2475 = vrot.slane %v2459, 2
    %v2476 = vrot.slane %v2460, 2
    %v2477 = vrot.slane %v2461, 2
    %v2478 = vrot.slane %v2462, 2
    %v2479 = vrot.slane %v2463, 2
    %v2480 = vrot.slane %v2464, 2
    %v2481 = vrot.slane %v2465, 2
    %v2482 = vrot.slane %v2466, 2
    %v2483 = vrot.slane %v2467, 2
    %v2484 = vrot.slane %v2468, 2
    %v2485 = vrot.slane %v2469, 2
    %v2486 = vrot.slane %v2470, 2
    %v2487 = vrot.slane %v2471, 2
    %v2488 = vsel %vm195, %v2484, %v2486
    %v2489 = vsel %vm195, %v2485, %v2487
    %v2490 = vsel %vm195, %v2482, %v2484
    %v2491 = vsel %vm195, %v2483, %v2485
    %v2492 = vsel %vm195, %v2480, %v2482
    %v2493 = vsel %vm195, %v2481, %v2483
    %v2494 = vsel %vm195, %v2478, %v2480
    %v2495 = vsel %vm195, %v2479, %v2481
    %v2496 = vsel %vm195, %v2476, %v2478
    %v2497 = vsel %vm195, %v2477, %v2479
    %v2498 = vsel %vm195, %v2474, %v2476
    %v2499 = vsel %vm195, %v2475, %v2477
    %v2500 = vsel %vm195, %v2472, %v2474
    %v2501 = vsel %vm195, %v2473, %v2475
    %v2502 = vsel %vm195, %v2486, %v2472
    %v2503 = vsel %vm195, %v2487, %v2473
    %v2504 = vmax.f32 %v2456, %v2500
    %v2505 = vmax.f32 %v2457, %v2501
    %v2506 = vmax.f32 %v2458, %v2498
    %v2507 = vmax.f32 %v2459, %v2499
    %v2508 = vmax.f32 %v2460, %v2496
    %v2509 = vmax.f32 %v2461, %v2497
    %v2510 = vmax.f32 %v2462, %v2494
    %v2511 = vmax.f32 %v2463, %v2495
    %v2512 = vmax.f32 %v2464, %v2492
    %v2513 = vmax.f32 %v2465, %v2493
    %v2514 = vmax.f32 %v2466, %v2490
    %v2515 = vmax.f32 %v2467, %v2491
    %v2516 = vmax.f32 %v2468, %v2488
    %v2517 = vmax.f32 %v2469, %v2489
    %v2518 = vmax.f32 %v2470, %v2502
    %v2519 = vmax.f32 %v2471, %v2503
    %v2520 = vmax.f32 %v2504, 0.0
    %v2521 = vmax.f32 %v2505, 0.0
    %v2522 = vmax.f32 %v2506, 0.0
    %v2523 = vmax.f32 %v2507, 0.0
    %v2524 = vmax.f32 %v2508, 0.0
    %v2525 = vmax.f32 %v2509, 0.0
    %v2526 = vmax.f32 %v2510, 0.0
    %v2527 = vmax.f32 %v2511, 0.0
    %v2528 = vmax.f32 %v2512, 0.0
    %v2529 = vmax.f32 %v2513, 0.0
    %v2530 = vmax.f32 %v2514, 0.0
    %v2531 = vmax.f32 %v2515, 0.0
    %v2532 = vmax.f32 %v2516, 0.0
    %v2533 = vmax.f32 %v2517, 0.0
    %v2534 = vmax.f32 %v2518, 0.0
    %v2535 = vmax.f32 %v2519, 0.0
    %v2536 = vld [vmem:[%s2] sm:$0xff]
    %v2537 = vld [vmem:[%s2 + $0x8] sm:$0xff]
    %v2538 = vld [vmem:[%s2 + $0x10] sm:$0xff]
    %v2539 = vld [vmem:[%s2 + $0x18] sm:$0xff]
    %v2540 = vld [vmem:[%s2 + $0x20] sm:$0xff]
    %v2541 = vld [vmem:[%s2 + $0x28] sm:$0xff]
    %v2542 = vld [vmem:[%s2 + $0x30] sm:$0xff]
    %v2543 = vld [vmem:[%s2 + $0x38] sm:$0xff]
    %v2544 = vld [vmem:[%s2 + $0x40] sm:$0xff]
    %v2545 = vld [vmem:[%s2 + $0x48] sm:$0xff]
    %v2546 = vld [vmem:[%s2 + $0x50] sm:$0xff]
    %v2547 = vld [vmem:[%s2 + $0x58] sm:$0xff]
    %v2548 = vld [vmem:[%s2 + $0x60] sm:$0xff]
    %v2549 = vld [vmem:[%s2 + $0x68] sm:$0xff]
    %v2550 = vld [vmem:[%s2 + $0x70] sm:$0xff]
    %v2551 = vld [vmem:[%s2 + $0x78] sm:$0xff]
    %v2552 = vmul.f32 %v1328, %v2536
    %v2553 = vmul.f32 %v1329, %v2537
    %v2554 = vmul.f32 %v1330, %v2538
    %v2555 = vmul.f32 %v1331, %v2539
    %v2556 = vmul.f32 %v1332, %v2540
    %v2557 = vmul.f32 %v1333, %v2541
    %v2558 = vmul.f32 %v1334, %v2542
    %v2559 = vmul.f32 %v1335, %v2543
    %v2560 = vmul.f32 %v1336, %v2544
    %v2561 = vmul.f32 %v1337, %v2545
    %v2562 = vmul.f32 %v1338, %v2546
    %v2563 = vmul.f32 %v1339, %v2547
    %v2564 = vmul.f32 %v1340, %v2548
    %v2565 = vmul.f32 %v1341, %v2549
    %v2566 = vmul.f32 %v1342, %v2550
    %v2567 = vmul.f32 %v1343, %v2551
    %v2568 = vld [vmem:[%s3] sm:$0xff]
    %v2569 = vld [vmem:[%s3 + $0x8] sm:$0xff]
    %v2570 = vld [vmem:[%s3 + $0x10] sm:$0xff]
    %v2571 = vld [vmem:[%s3 + $0x18] sm:$0xff]
    %v2572 = vld [vmem:[%s3 + $0x20] sm:$0xff]
    %v2573 = vld [vmem:[%s3 + $0x28] sm:$0xff]
    %v2574 = vld [vmem:[%s3 + $0x30] sm:$0xff]
    %v2575 = vld [vmem:[%s3 + $0x38] sm:$0xff]
    %v2576 = vld [vmem:[%s3 + $0x40] sm:$0xff]
    %v2577 = vld [vmem:[%s3 + $0x48] sm:$0xff]
    %v2578 = vld [vmem:[%s3 + $0x50] sm:$0xff]
    %v2579 = vld [vmem:[%s3 + $0x58] sm:$0xff]
    %v2580 = vld [vmem:[%s3 + $0x60] sm:$0xff]
    %v2581 = vld [vmem:[%s3 + $0x68] sm:$0xff]
    %v2582 = vld [vmem:[%s3 + $0x70] sm:$0xff]
    %v2583 = vld [vmem:[%s3 + $0x78] sm:$0xff]
    %v2584 = vmul.f32 %v2520, %v2568
    %v2585 = vmul.f32 %v2521, %v2569
    %v2586 = vmul.f32 %v2522, %v2570
    %v2587 = vmul.f32 %v2523, %v2571
    %v2588 = vmul.f32 %v2524, %v2572
    %v2589 = vmul.f32 %v2525, %v2573
    %v2590 = vmul.f32 %v2526, %v2574
    %v2591 = vmul.f32 %v2527, %v2575
    %v2592 = vmul.f32 %v2528, %v2576
    %v2593 = vmul.f32 %v2529, %v2577
    %v2594 = vmul.f32 %v2530, %v2578
    %v2595 = vmul.f32 %v2531, %v2579
    %v2596 = vmul.f32 %v2532, %v2580
    %v2597 = vmul.f32 %v2533, %v2581
    %v2598 = vmul.f32 %v2534, %v2582
    %v2599 = vmul.f32 %v2535, %v2583
    %v2600 = vadd.f32 %v2552, %v2584
    %v2601 = vadd.f32 %v2553, %v2585
    %v2602 = vadd.f32 %v2554, %v2586
    %v2603 = vadd.f32 %v2555, %v2587
    %v2604 = vadd.f32 %v2556, %v2588
    %v2605 = vadd.f32 %v2557, %v2589
    %v2606 = vadd.f32 %v2558, %v2590
    %v2607 = vadd.f32 %v2559, %v2591
    %v2608 = vadd.f32 %v2560, %v2592
    %v2609 = vadd.f32 %v2561, %v2593
    %v2610 = vadd.f32 %v2562, %v2594
    %v2611 = vadd.f32 %v2563, %v2595
    %v2612 = vadd.f32 %v2564, %v2596
    %v2613 = vadd.f32 %v2565, %v2597
    %v2614 = vadd.f32 %v2566, %v2598
    %v2615 = vadd.f32 %v2567, %v2599
    %v2616 = vld [vmem:[%s4] sm:$0x3]
    %vm2617 = vcmask 523264
    %v2619 = vsel %vm2617, %v2616, 0
    %2621 = vmatprep.subr.mxu0 %v2601
    %2622 = vmatpush1.msra.mxu0 %v2600
    %2623 = vmatprep.subr.mxu0 %v2603
    %2624 = vmatpush1.msra.mxu0 %v2602
    %2625 = vmatprep.subr.mxu0 %v2605
    %2626 = vmatpush1.msra.mxu0 %v2604
    %2627 = vmatprep.subr.mxu0 %v2607
    %2628 = vmatpush1.msra.mxu0 %v2606
    %2629 = vmatprep.subr.mxu0 %v2609
    %2630 = vmatpush1.msra.mxu0 %v2608
    %2631 = vmatprep.subr.mxu0 %v2611
    %2632 = vmatpush1.msra.mxu0 %v2610
    %2633 = vmatprep.subr.mxu0 %v2613
    %2634 = vmatpush1.msra.mxu0 %v2612
    %2635 = vmatprep.subr.mxu0 %v2615
    %2636 = vmatpush1.msra.mxu0 %v2614
    %2637 = vmatprep.subr.mxu0 0.0
    %2638 = vmatpush1.msra.mxu0 0.0
    %2639 = vmatprep.subr.mxu0 0.0
    %2640 = vmatpush1.msra.mxu0 0.0
    %2641 = vmatprep.subr.mxu0 0.0
    %2642 = vmatpush1.msra.mxu0 0.0
    %2643 = vmatprep.subr.mxu0 0.0
    %2644 = vmatpush1.msra.mxu0 0.0
    %2645 = vmatprep.subr.mxu0 0.0
    %2646 = vmatpush1.msra.mxu0 0.0
    %2647 = vmatprep.subr.mxu0 0.0
    %2648 = vmatpush1.msra.mxu0 0.0
    %2649 = vmatprep.subr.mxu0 0.0
    %2650 = vmatpush1.msra.mxu0 0.0
    %2651 = vmatprep.subr.mxu0 0.0
    %2652 = vmatpush1.msra.mxu0 0.0
    %2653 = vmatprep.subr.mxu0 0.0
    %2654 = vmatpush1.msra.mxu0 0.0
    %2655 = vmatprep.subr.mxu0 0.0
    %2656 = vmatpush1.msra.mxu0 0.0
    %2657 = vmatprep.subr.mxu0 0.0
    %2658 = vmatpush1.msra.mxu0 0.0
    %2659 = vmatprep.subr.mxu0 0.0
    %2660 = vmatpush1.msra.mxu0 0.0
    %2661 = vmatprep.subr.mxu0 0.0
    %2662 = vmatpush1.msra.mxu0 0.0
    %2663 = vmatprep.subr.mxu0 0.0
    %2664 = vmatpush1.msra.mxu0 0.0
    %2665 = vmatprep.subr.mxu0 0.0
    %2666 = vmatpush1.msra.mxu0 0.0
    %2667 = vmatprep.subr.mxu0 0.0
    %2668 = vmatpush1.msra.mxu0 0.0
    %2669 = vmatprep.subr.mxu0 0.0
    %2670 = vmatpush1.msra.mxu0 0.0
    %2671 = vmatprep.subr.mxu0 0.0
    %2672 = vmatpush1.msra.mxu0 0.0
    %2673 = vmatprep.subr.mxu0 0.0
    %2674 = vmatpush1.msra.mxu0 0.0
    %2675 = vmatprep.subr.mxu0 0.0
    %2676 = vmatpush1.msra.mxu0 0.0
    %2677 = vmatprep.subr.mxu0 0.0
    %2678 = vmatpush1.msra.mxu0 0.0
    %2679 = vmatprep.subr.mxu0 0.0
    %2680 = vmatpush1.msra.mxu0 0.0
    %2681 = vmatprep.subr.mxu0 0.0
    %2682 = vmatpush1.msra.mxu0 0.0
    %2683 = vmatprep.subr.mxu0 0.0
    %2684 = vmatpush1.msra.mxu0 0.0
    %2685 = vmatprep.mubr.f32.mxu0 0.0
    %2686 = vmatmul.mubr.f32.gmra.mrb[0].mxu0 %v2619
    %v2687 = vpop.f32.mrb[0].mxu0
    %v2688 = vadd.f32 0.0, %v2687
    %v2689 = vpop.f32.mrb[0].mxu0
    %v2690 = vadd.f32 0.0, %v2689
    %2691 = vdwg.mxu0
    %vm2692 = vcmask 1041408
    %v2693 = vsel %vm2692, %v2688, 0.0
    %v2694 = vsel %vm2692, %v2690, 0.0
    %v2695 = vadd.f32 %v2693, %v2694
    %2696 = vadd.xlane.f32.xlu0 %v2695
    %v2697 = vpop.xlane.xlu0 %2696
    %s2698 = sld [smem:[#allocation9 + $0x4]]
    %v2699 = vstv %s2698
    %v2700 = vadd.f32 %v2697, %v2699
    %2701 = vst [vmem:[%s10] sm:$0x3] %v2700
    // Predicated region
    $region62: #{cnn_block_forward.1} parent=1 // pred_check
      _
    $region63: #{cnn_block_forward.1} parent=1 // pred_check_branch
      %2703 = sbr.rel (0) target = $region65
    $region64: #{cnn_block_forward.1} parent=1 // pred_region
      _
    $region65: #{cnn_block_forward.1} parent=1 // pred_fallthru
      _
    // Predicated region
    $region66: #{cnn_block_forward.1} parent=1 // pred_check
      _
    $region67: #{cnn_block_forward.1} parent=1 // pred_check_branch
      %2705 = sbr.rel (0) target = $region69
    $region68: #{cnn_block_forward.1} parent=1 // pred_region
      _
    $region69: #{cnn_block_forward.1} parent=1 // pred_fallthru
      _
    %2706 = vsyncpa [#allocation3], 1
    %2707 = vsyncpa [#allocation5], 1
    %2708 = vsyncpa [#allocation8], 1

</llo_original>
